<compile_context>
chip_gen: v6e
topology: v6e:2x2x1
jax: 0.10.0
libtpu: 0.0.40
codegen_flags: <defaults>
</compile_context>

<pallas_src>
import functools

import jax
import jax.numpy as jnp
from jax.experimental import pallas as pl
from jax.experimental.pallas import tpu as pltpu

_LANE = 128
_DEFAULT_BATCH_TILE = 2048  # sweep 1024-8192; bias larger on v7x (~3.2 TB/s HBM)


def _round_up(x, m):
    return (x + m - 1) // m * m


def _qmlp_kernel(obs_ref, act_ref, w1o_ref, w1a_ref, b1_ref, w2_ref, b2_ref,
                 w3_ref, b3_ref, out_ref, *, lane_dense):
    # Layer 1: fused concat -> x @ W1 == obs @ W1[:obs_dim] + act @ W1[obs_dim:]
    h = jnp.dot(obs_ref[...], w1o_ref[...], preferred_element_type=jnp.float32)
    h = h + jnp.dot(act_ref[...], w1a_ref[...], preferred_element_type=jnp.float32)
    h = jnp.maximum(h + b1_ref[...], 0.0)                       # ReLU (f32, VPU)

    # Layer 2: Linear + ReLU.  Cast activations back to the weight dtype so the
    # MXU keeps streaming 16 bf16 rows per push; accumulate in f32.
    h = jnp.dot(h.astype(w2_ref.dtype), w2_ref[...],
                preferred_element_type=jnp.float32)
    h = jnp.maximum(h + b2_ref[...], 0.0)

    # Output layer (fan_out == 1): keep it off the MXU.  w3 arrives as a (1, H2)
    # row; VPU multiply + XLU lane reduce replace a 1-column vmatmul stream.
    q = jnp.sum(h * w3_ref[...], axis=-1, keepdims=True) + b3_ref[...]   # (bt, 1)

    if lane_dense:
        # Lane-dense store: batch maps to lanes -> dense vst instead of one
        # masked vst.msk per 8 rows.
        bt = q.shape[0]
        out_ref[...] = q.reshape(bt // _LANE, _LANE)
    else:
        out_ref[...] = q


def mlp_q_function(obs, act, params, *, batch_tile=None,
                   param_dtype=jnp.bfloat16, lane_dense_out=True):
    """Pallas forward of MLPQFunction. Returns q with shape [B] (last dim squeezed)."""
    (w1, b1), (w2, b2), (w3, b3) = params
    B, obs_dim = obs.shape
    act_dim = act.shape[1]
    H1 = w1.shape[1]
    H2 = w2.shape[1]
    assert w1.shape[0] == obs_dim + act_dim
    assert w3.shape == (H2, 1)

    # --- batch tiling --------------------------------------------------------
    if batch_tile is None:
        batch_tile = (_DEFAULT_BATCH_TILE if B > _DEFAULT_BATCH_TILE
                      else _round_up(B, _LANE))
    assert batch_tile % _LANE == 0, "batch_tile must be a multiple of 128"
    b_pad = _round_up(B, batch_tile)
    n_tiles = b_pad // batch_tile
    if lane_dense_out and n_tiles > 1:
        # Keeps the (batch_tile//128, 128) output block (8,128)-aligned.
        assert (batch_tile // _LANE) % 8 == 0, \
            "multi-tile lane-dense output needs batch_tile % 1024 == 0"

    # --- operand preparation (parameter-sized / batch-edge only) -------------
    if b_pad != B:
        obs = jnp.pad(obs, ((0, b_pad - B), (0, 0)))
        act = jnp.pad(act, ((0, b_pad - B), (0, 0)))
    obs = obs.astype(param_dtype)
    act = act.astype(param_dtype)

    w1o = w1[:obs_dim, :].astype(param_dtype)      # split W1 -> fused concat
    w1a = w1[obs_dim:, :].astype(param_dtype)
    w2c = w2.astype(param_dtype)
    b1r = b1.reshape(1, H1).astype(jnp.float32)
    b2r = b2.reshape(1, H2).astype(jnp.float32)
    w3r = w3.reshape(1, H2).astype(jnp.float32)    # single output column as a row
    b3r = b3.reshape(1, 1).astype(jnp.float32)

    full = lambda a: pl.BlockSpec(a.shape, lambda i: (0,) * a.ndim)

    def build(lane_dense):
        if lane_dense:
            out_shape = jax.ShapeDtypeStruct((b_pad // _LANE, _LANE), jnp.float32)
            out_spec = pl.BlockSpec((batch_tile // _LANE, _LANE), lambda i: (i, 0))
        else:
            out_shape = jax.ShapeDtypeStruct((b_pad, 1), jnp.float32)
            out_spec = pl.BlockSpec((batch_tile, 1), lambda i: (i, 0))
        kernel = functools.partial(_qmlp_kernel, lane_dense=lane_dense)
        return pl.pallas_call(
            kernel,
            out_shape=out_shape,
            grid_spec=pltpu.PrefetchScalarGridSpec(
                num_scalar_prefetch=0,
                grid=(n_tiles,),
                in_specs=[
                    pl.BlockSpec((batch_tile, obs_dim), lambda i: (i, 0)),
                    pl.BlockSpec((batch_tile, act_dim), lambda i: (i, 0)),
                    full(w1o), full(w1a), full(b1r),
                    full(w2c), full(b2r),
                    full(w3r), full(b3r),
                ],
                out_specs=out_spec,
            ),
            compiler_params=pltpu.CompilerParams(
                dimension_semantics=("parallel",),
                vmem_limit_bytes=32 * 1024 * 1024,
            ),
        )

    def run(lane_dense):
        out = build(lane_dense)(obs, act, w1o, w1a, b1r, w2c, b2r, w3r, b3r)
        return out.reshape(-1)[:B]

    if lane_dense_out:
        try:
            return jax.block_until_ready(run(True))
        except Exception:
            # TODO(synk): lane-dense relayout ((bt,1)->(bt//128,128)) not lowered on
            # this Mosaic build; fall back to the masked column store.
            pass
    return jax.block_until_ready(run(False))


def init_linear(key, fan_in, fan_out):
    """nn.Linear-style init U(-1/sqrt(fan_in), 1/sqrt(fan_in)); weight stored [in, out]."""
    kw, kb = jax.random.split(key)
    bound = 1.0 / jnp.sqrt(jnp.float32(fan_in))
    w = jax.random.uniform(kw, (fan_in, fan_out), jnp.float32, -bound, bound)
    b = jax.random.uniform(kb, (fan_out,), jnp.float32, -bound, bound)
    return w, b


def reference_forward(obs, act, params, compute_dtype=None):
    """Pure-JAX reference.  If compute_dtype is set, mimics the kernel's casts."""
    (w1, b1), (w2, b2), (w3, b3) = params
    x = jnp.concatenate([obs, act], axis=-1)
    if compute_dtype is not None:
        x = x.astype(compute_dtype)
        w1 = w1.astype(compute_dtype)
        w2 = w2.astype(compute_dtype)
    h = jnp.maximum(jnp.dot(x, w1, preferred_element_type=jnp.float32)
                    + b1.reshape(1, -1), 0.0)
    if compute_dtype is not None:
        h = h.astype(compute_dtype)
    h = jnp.maximum(jnp.dot(h, w2, preferred_element_type=jnp.float32)
                    + b2.reshape(1, -1), 0.0)
    q = jnp.dot(h, w3.astype(jnp.float32),
                preferred_element_type=jnp.float32) + b3.reshape(1, -1)
    return jnp.squeeze(q, -1)


if __name__ == "__main__":
    # Small shapes consistent with MLPQFunction(obs_dim, act_dim, hidden_sizes, nn.ReLU)
    B = 8
    obs_dim, act_dim = 12, 4
    hidden_sizes = (32, 32)

    key = jax.random.PRNGKey(0)
    k_obs, k_act, k1, k2, k3 = jax.random.split(key, 5)
    obs = jax.random.normal(k_obs, (B, obs_dim), jnp.float32)
    act = jax.random.normal(k_act, (B, act_dim), jnp.float32)

    in_dim = obs_dim + act_dim
    params = (
        init_linear(k1, in_dim, hidden_sizes[0]),
        init_linear(k2, hidden_sizes[0], hidden_sizes[1]),
        init_linear(k3, hidden_sizes[1], 1),
    )

    q = mlp_q_function(obs, act, params)
    q = jax.block_until_ready(q)
    assert q.shape == (B,)

    # Tight check against a reference that applies the same bf16 casts.
    q_mimic = reference_forward(obs, act, params, compute_dtype=jnp.bfloat16)
    assert jnp.allclose(q, q_mimic, atol=1e-4, rtol=1e-4), (q, q_mimic)

    # Loose check against the pure-f32 (PyTorch-equivalent) math.
    q_f32 = reference_forward(obs, act, params)
    assert jnp.allclose(q, q_f32, atol=5e-2, rtol=5e-2), (q, q_f32)

    print("KERNEL_OK")
</pallas_src>

<mosaic_0001>
module attributes {stable_mosaic.version = 11 : i64} {
  func.func @_qmlp_kernel(%arg0: i32, %arg1: memref<128x12xbf16, #tpu.memory_space<vmem>>, %arg2: memref<128x4xbf16, #tpu.memory_space<vmem>>, %arg3: memref<12x32xbf16, #tpu.memory_space<vmem>>, %arg4: memref<4x32xbf16, #tpu.memory_space<vmem>>, %arg5: memref<1x32xf32, #tpu.memory_space<vmem>>, %arg6: memref<32x32xbf16, #tpu.memory_space<vmem>>, %arg7: memref<1x32xf32, #tpu.memory_space<vmem>>, %arg8: memref<1x32xf32, #tpu.memory_space<vmem>>, %arg9: memref<1x1xf32, #tpu.memory_space<vmem>>, %arg10: memref<1x128xf32, #tpu.memory_space<vmem>>) attributes {dimension_semantics = [#tpu.dimension_semantics<parallel>], iteration_bounds = array<i64: 1>, scalar_prefetch = 0 : i64, scratch_operands = 0 : i64, tpu.core_type = #tpu.core_type<tc>, window_params = [{transform_indices = @transform_0, window_bounds = array<i64: 128, 12>}, {transform_indices = @transform_1, window_bounds = array<i64: 128, 4>}, {pipeline_mode = #tpu.pipeline_mode<synchronous>, transform_indices = @transform_2, window_bounds = array<i64: 12, 32>}, {pipeline_mode = #tpu.pipeline_mode<synchronous>, transform_indices = @transform_3, window_bounds = array<i64: 4, 32>}, {pipeline_mode = #tpu.pipeline_mode<synchronous>, transform_indices = @transform_4, window_bounds = array<i64: 1, 32>}, {pipeline_mode = #tpu.pipeline_mode<synchronous>, transform_indices = @transform_5, window_bounds = array<i64: 32, 32>}, {pipeline_mode = #tpu.pipeline_mode<synchronous>, transform_indices = @transform_6, window_bounds = array<i64: 1, 32>}, {pipeline_mode = #tpu.pipeline_mode<synchronous>, transform_indices = @transform_7, window_bounds = array<i64: 1, 32>}, {pipeline_mode = #tpu.pipeline_mode<synchronous>, transform_indices = @transform_8, window_bounds = array<i64: 1, 1>}, {transform_indices = @transform_9, window_bounds = array<i64: 1, 128>}]} {
    %c0 = arith.constant 0 : index
    %c0_0 = arith.constant 0 : index
    %0 = vector.load %arg1[%c0, %c0_0] : memref<128x12xbf16, #tpu.memory_space<vmem>>, vector<128x12xbf16>
    %c0_1 = arith.constant 0 : index
    %c0_2 = arith.constant 0 : index
    %1 = vector.load %arg3[%c0_1, %c0_2] : memref<12x32xbf16, #tpu.memory_space<vmem>>, vector<12x32xbf16>
    %cst = arith.constant dense<0.000000e+00> : vector<128x32xf32>
    %2 = tpu.matmul %0, %1, %cst {dimension_numbers = #tpu.dot_dimension_numbers<[1], [0], [0], [1], [0, 0, 1, 1], [], []>} : vector<128x12xbf16>, vector<12x32xbf16>, vector<128x32xf32> -> vector<128x32xf32>
    %c0_3 = arith.constant 0 : index
    %c0_4 = arith.constant 0 : index
    %3 = vector.load %arg2[%c0_3, %c0_4] : memref<128x4xbf16, #tpu.memory_space<vmem>>, vector<128x4xbf16>
    %c0_5 = arith.constant 0 : index
    %c0_6 = arith.constant 0 : index
    %4 = vector.load %arg4[%c0_5, %c0_6] : memref<4x32xbf16, #tpu.memory_space<vmem>>, vector<4x32xbf16>
    %cst_7 = arith.constant dense<0.000000e+00> : vector<128x32xf32>
    %5 = tpu.matmul %3, %4, %cst_7 {dimension_numbers = #tpu.dot_dimension_numbers<[1], [0], [0], [1], [0, 0, 1, 1], [], []>} : vector<128x4xbf16>, vector<4x32xbf16>, vector<128x32xf32> -> vector<128x32xf32>
    %6 = arith.addf %2, %5 : vector<128x32xf32>
    %c0_8 = arith.constant 0 : index
    %c0_9 = arith.constant 0 : index
    %7 = vector.load %arg5[%c0_8, %c0_9] : memref<1x32xf32, #tpu.memory_space<vmem>>, vector<1x32xf32>
    %8 = vector.broadcast %7 : vector<1x32xf32> to vector<128x32xf32>
    %9 = arith.addf %6, %8 : vector<128x32xf32>
    %cst_10 = arith.constant 0.000000e+00 : f32
    %10 = vector.broadcast %cst_10 : f32 to vector<128x32xf32>
    %11 = arith.maximumf %9, %10 : vector<128x32xf32>
    %12 = arith.truncf %11 : vector<128x32xf32> to vector<128x32xbf16>
    %c0_11 = arith.constant 0 : index
    %c0_12 = arith.constant 0 : index
    %13 = vector.load %arg6[%c0_11, %c0_12] : memref<32x32xbf16, #tpu.memory_space<vmem>>, vector<32x32xbf16>
    %cst_13 = arith.constant dense<0.000000e+00> : vector<128x32xf32>
    %14 = tpu.matmul %12, %13, %cst_13 {dimension_numbers = #tpu.dot_dimension_numbers<[1], [0], [0], [1], [0, 0, 1, 1], [], []>} : vector<128x32xbf16>, vector<32x32xbf16>, vector<128x32xf32> -> vector<128x32xf32>
    %c0_14 = arith.constant 0 : index
    %c0_15 = arith.constant 0 : index
    %15 = vector.load %arg7[%c0_14, %c0_15] : memref<1x32xf32, #tpu.memory_space<vmem>>, vector<1x32xf32>
    %16 = vector.broadcast %15 : vector<1x32xf32> to vector<128x32xf32>
    %17 = arith.addf %14, %16 : vector<128x32xf32>
    %cst_16 = arith.constant 0.000000e+00 : f32
    %18 = vector.broadcast %cst_16 : f32 to vector<128x32xf32>
    %19 = arith.maximumf %17, %18 : vector<128x32xf32>
    %c0_17 = arith.constant 0 : index
    %c0_18 = arith.constant 0 : index
    %20 = vector.load %arg8[%c0_17, %c0_18] : memref<1x32xf32, #tpu.memory_space<vmem>>, vector<1x32xf32>
    %21 = vector.broadcast %20 : vector<1x32xf32> to vector<128x32xf32>
    %22 = arith.mulf %19, %21 : vector<128x32xf32>
    %cst_19 = arith.constant dense<0.000000e+00> : vector<128xf32>
    %23 = vector.multi_reduction <add>, %22, %cst_19 [1] : vector<128x32xf32> to vector<128xf32>
    %24 = vector.shape_cast %23 : vector<128xf32> to vector<128x1xf32>
    %c0_20 = arith.constant 0 : index
    %c0_21 = arith.constant 0 : index
    %25 = vector.load %arg9[%c0_20, %c0_21] : memref<1x1xf32, #tpu.memory_space<vmem>>, vector<1x1xf32>
    %26 = vector.broadcast %25 : vector<1x1xf32> to vector<128x1xf32>
    %27 = arith.addf %24, %26 : vector<128x1xf32>
    %28 = vector.shape_cast %27 : vector<128x1xf32> to vector<1x128xf32>
    %c0_22 = arith.constant 0 : index
    %c0_23 = arith.constant 0 : index
    %29 = vector.load %arg10[%c0_22, %c0_23] : memref<1x128xf32, #tpu.memory_space<vmem>>, vector<1x128xf32>
    tpu.vector_store %arg10[%c0_22, %c0_23], %28 {strides = array<i32>} : memref<1x128xf32, #tpu.memory_space<vmem>>, vector<1x128xf32>,
    return
  }
  func.func @transform_0(%arg0: i32) -> (i32, i32) {
    %c0_i32 = arith.constant 0 : i32
    %c0_i32_0 = arith.constant 0 : i32
    return %arg0, %c0_i32 : i32, i32
  }
  func.func @transform_1(%arg0: i32) -> (i32, i32) {
    %c0_i32 = arith.constant 0 : i32
    %c0_i32_0 = arith.constant 0 : i32
    return %arg0, %c0_i32 : i32, i32
  }
  func.func @transform_2(%arg0: i32) -> (i32, i32) {
    %c0_i32 = arith.constant 0 : i32
    %c0_i32_0 = arith.constant 0 : i32
    %c0_i32_1 = arith.constant 0 : i32
    return %c0_i32, %c0_i32_0 : i32, i32
  }
  func.func @transform_3(%arg0: i32) -> (i32, i32) {
    %c0_i32 = arith.constant 0 : i32
    %c0_i32_0 = arith.constant 0 : i32
    %c0_i32_1 = arith.constant 0 : i32
    return %c0_i32, %c0_i32_0 : i32, i32
  }
  func.func @transform_4(%arg0: i32) -> (i32, i32) {
    %c0_i32 = arith.constant 0 : i32
    %c0_i32_0 = arith.constant 0 : i32
    %c0_i32_1 = arith.constant 0 : i32
    return %c0_i32, %c0_i32_0 : i32, i32
  }
  func.func @transform_5(%arg0: i32) -> (i32, i32) {
    %c0_i32 = arith.constant 0 : i32
    %c0_i32_0 = arith.constant 0 : i32
    %c0_i32_1 = arith.constant 0 : i32
    return %c0_i32, %c0_i32_0 : i32, i32
  }
  func.func @transform_6(%arg0: i32) -> (i32, i32) {
    %c0_i32 = arith.constant 0 : i32
    %c0_i32_0 = arith.constant 0 : i32
    %c0_i32_1 = arith.constant 0 : i32
    return %c0_i32, %c0_i32_0 : i32, i32
  }
  func.func @transform_7(%arg0: i32) -> (i32, i32) {
    %c0_i32 = arith.constant 0 : i32
    %c0_i32_0 = arith.constant 0 : i32
    %c0_i32_1 = arith.constant 0 : i32
    return %c0_i32, %c0_i32_0 : i32, i32
  }
  func.func @transform_8(%arg0: i32) -> (i32, i32) {
    %c0_i32 = arith.constant 0 : i32
    %c0_i32_0 = arith.constant 0 : i32
    %c0_i32_1 = arith.constant 0 : i32
    return %c0_i32, %c0_i32_0 : i32, i32
  }
  func.func @transform_9(%arg0: i32) -> (i32, i32) {
    %c0_i32 = arith.constant 0 : i32
    %c0_i32_0 = arith.constant 0 : i32
    return %arg0, %c0_i32 : i32, i32
  }
}

module attributes {stable_mosaic.version = 11 : i64} {
  func.func @_qmlp_kernel(%arg0: i32, %arg1: memref<128x12xbf16, #tpu.memory_space<vmem>>, %arg2: memref<128x4xbf16, #tpu.memory_space<vmem>>, %arg3: memref<12x32xbf16, #tpu.memory_space<vmem>>, %arg4: memref<4x32xbf16, #tpu.memory_space<vmem>>, %arg5: memref<1x32xf32, #tpu.memory_space<vmem>>, %arg6: memref<32x32xbf16, #tpu.memory_space<vmem>>, %arg7: memref<1x32xf32, #tpu.memory_space<vmem>>, %arg8: memref<1x32xf32, #tpu.memory_space<vmem>>, %arg9: memref<1x1xf32, #tpu.memory_space<vmem>>, %arg10: memref<128x1xf32, #tpu.memory_space<vmem>>) attributes {dimension_semantics = [#tpu.dimension_semantics<parallel>], iteration_bounds = array<i64: 1>, scalar_prefetch = 0 : i64, scratch_operands = 0 : i64, tpu.core_type = #tpu.core_type<tc>, window_params = [{transform_indices = @transform_0, window_bounds = array<i64: 128, 12>}, {transform_indices = @transform_1, window_bounds = array<i64: 128, 4>}, {pipeline_mode = #tpu.pipeline_mode<synchronous>, transform_indices = @transform_2, window_bounds = array<i64: 12, 32>}, {pipeline_mode = #tpu.pipeline_mode<synchronous>, transform_indices = @transform_3, window_bounds = array<i64: 4, 32>}, {pipeline_mode = #tpu.pipeline_mode<synchronous>, transform_indices = @transform_4, window_bounds = array<i64: 1, 32>}, {pipeline_mode = #tpu.pipeline_mode<synchronous>, transform_indices = @transform_5, window_bounds = array<i64: 32, 32>}, {pipeline_mode = #tpu.pipeline_mode<synchronous>, transform_indices = @transform_6, window_bounds = array<i64: 1, 32>}, {pipeline_mode = #tpu.pipeline_mode<synchronous>, transform_indices = @transform_7, window_bounds = array<i64: 1, 32>}, {pipeline_mode = #tpu.pipeline_mode<synchronous>, transform_indices = @transform_8, window_bounds = array<i64: 1, 1>}, {transform_indices = @transform_9, window_bounds = array<i64: 128, 1>}]} {
    %c0 = arith.constant 0 : index
    %c0_0 = arith.constant 0 : index
    %0 = vector.load %arg1[%c0, %c0_0] : memref<128x12xbf16, #tpu.memory_space<vmem>>, vector<128x12xbf16>
    %c0_1 = arith.constant 0 : index
    %c0_2 = arith.constant 0 : index
    %1 = vector.load %arg3[%c0_1, %c0_2] : memref<12x32xbf16, #tpu.memory_space<vmem>>, vector<12x32xbf16>
    %cst = arith.constant dense<0.000000e+00> : vector<128x32xf32>
    %2 = tpu.matmul %0, %1, %cst {dimension_numbers = #tpu.dot_dimension_numbers<[1], [0], [0], [1], [0, 0, 1, 1], [], []>} : vector<128x12xbf16>, vector<12x32xbf16>, vector<128x32xf32> -> vector<128x32xf32>
    %c0_3 = arith.constant 0 : index
    %c0_4 = arith.constant 0 : index
    %3 = vector.load %arg2[%c0_3, %c0_4] : memref<128x4xbf16, #tpu.memory_space<vmem>>, vector<128x4xbf16>
    %c0_5 = arith.constant 0 : index
    %c0_6 = arith.constant 0 : index
    %4 = vector.load %arg4[%c0_5, %c0_6] : memref<4x32xbf16, #tpu.memory_space<vmem>>, vector<4x32xbf16>
    %cst_7 = arith.constant dense<0.000000e+00> : vector<128x32xf32>
    %5 = tpu.matmul %3, %4, %cst_7 {dimension_numbers = #tpu.dot_dimension_numbers<[1], [0], [0], [1], [0, 0, 1, 1], [], []>} : vector<128x4xbf16>, vector<4x32xbf16>, vector<128x32xf32> -> vector<128x32xf32>
    %6 = arith.addf %2, %5 : vector<128x32xf32>
    %c0_8 = arith.constant 0 : index
    %c0_9 = arith.constant 0 : index
    %7 = vector.load %arg5[%c0_8, %c0_9] : memref<1x32xf32, #tpu.memory_space<vmem>>, vector<1x32xf32>
    %8 = vector.broadcast %7 : vector<1x32xf32> to vector<128x32xf32>
    %9 = arith.addf %6, %8 : vector<128x32xf32>
    %cst_10 = arith.constant 0.000000e+00 : f32
    %10 = vector.broadcast %cst_10 : f32 to vector<128x32xf32>
    %11 = arith.maximumf %9, %10 : vector<128x32xf32>
    %12 = arith.truncf %11 : vector<128x32xf32> to vector<128x32xbf16>
    %c0_11 = arith.constant 0 : index
    %c0_12 = arith.constant 0 : index
    %13 = vector.load %arg6[%c0_11, %c0_12] : memref<32x32xbf16, #tpu.memory_space<vmem>>, vector<32x32xbf16>
    %cst_13 = arith.constant dense<0.000000e+00> : vector<128x32xf32>
    %14 = tpu.matmul %12, %13, %cst_13 {dimension_numbers = #tpu.dot_dimension_numbers<[1], [0], [0], [1], [0, 0, 1, 1], [], []>} : vector<128x32xbf16>, vector<32x32xbf16>, vector<128x32xf32> -> vector<128x32xf32>
    %c0_14 = arith.constant 0 : index
    %c0_15 = arith.constant 0 : index
    %15 = vector.load %arg7[%c0_14, %c0_15] : memref<1x32xf32, #tpu.memory_space<vmem>>, vector<1x32xf32>
    %16 = vector.broadcast %15 : vector<1x32xf32> to vector<128x32xf32>
    %17 = arith.addf %14, %16 : vector<128x32xf32>
    %cst_16 = arith.constant 0.000000e+00 : f32
    %18 = vector.broadcast %cst_16 : f32 to vector<128x32xf32>
    %19 = arith.maximumf %17, %18 : vector<128x32xf32>
    %c0_17 = arith.constant 0 : index
    %c0_18 = arith.constant 0 : index
    %20 = vector.load %arg8[%c0_17, %c0_18] : memref<1x32xf32, #tpu.memory_space<vmem>>, vector<1x32xf32>
    %21 = vector.broadcast %20 : vector<1x32xf32> to vector<128x32xf32>
    %22 = arith.mulf %19, %21 : vector<128x32xf32>
    %cst_19 = arith.constant dense<0.000000e+00> : vector<128xf32>
    %23 = vector.multi_reduction <add>, %22, %cst_19 [1] : vector<128x32xf32> to vector<128xf32>
    %24 = vector.shape_cast %23 : vector<128xf32> to vector<128x1xf32>
    %c0_20 = arith.constant 0 : index
    %c0_21 = arith.constant 0 : index
    %25 = vector.load %arg9[%c0_20, %c0_21] : memref<1x1xf32, #tpu.memory_space<vmem>>, vector<1x1xf32>
    %26 = vector.broadcast %25 : vector<1x1xf32> to vector<128x1xf32>
    %27 = arith.addf %24, %26 : vector<128x1xf32>
    %c0_22 = arith.constant 0 : index
    %c0_23 = arith.constant 0 : index
    %28 = vector.load %arg10[%c0_22, %c0_23] : memref<128x1xf32, #tpu.memory_space<vmem>>, vector<128x1xf32>
    tpu.vector_store %arg10[%c0_22, %c0_23], %27 {strides = array<i32>} : memref<128x1xf32, #tpu.memory_space<vmem>>, vector<128x1xf32>,
    return
  }
  func.func @transform_0(%arg0: i32) -> (i32, i32) {
    %c0_i32 = arith.constant 0 : i32
    %c0_i32_0 = arith.constant 0 : i32
    return %arg0, %c0_i32 : i32, i32
  }
  func.func @transform_1(%arg0: i32) -> (i32, i32) {
    %c0_i32 = arith.constant 0 : i32
    %c0_i32_0 = arith.constant 0 : i32
    return %arg0, %c0_i32 : i32, i32
  }
  func.func @transform_2(%arg0: i32) -> (i32, i32) {
    %c0_i32 = arith.constant 0 : i32
    %c0_i32_0 = arith.constant 0 : i32
    %c0_i32_1 = arith.constant 0 : i32
    return %c0_i32, %c0_i32_0 : i32, i32
  }
  func.func @transform_3(%arg0: i32) -> (i32, i32) {
    %c0_i32 = arith.constant 0 : i32
    %c0_i32_0 = arith.constant 0 : i32
    %c0_i32_1 = arith.constant 0 : i32
    return %c0_i32, %c0_i32_0 : i32, i32
  }
  func.func @transform_4(%arg0: i32) -> (i32, i32) {
    %c0_i32 = arith.constant 0 : i32
    %c0_i32_0 = arith.constant 0 : i32
    %c0_i32_1 = arith.constant 0 : i32
    return %c0_i32, %c0_i32_0 : i32, i32
  }
  func.func @transform_5(%arg0: i32) -> (i32, i32) {
    %c0_i32 = arith.constant 0 : i32
    %c0_i32_0 = arith.constant 0 : i32
    %c0_i32_1 = arith.constant 0 : i32
    return %c0_i32, %c0_i32_0 : i32, i32
  }
  func.func @transform_6(%arg0: i32) -> (i32, i32) {
    %c0_i32 = arith.constant 0 : i32
    %c0_i32_0 = arith.constant 0 : i32
    %c0_i32_1 = arith.constant 0 : i32
    return %c0_i32, %c0_i32_0 : i32, i32
  }
  func.func @transform_7(%arg0: i32) -> (i32, i32) {
    %c0_i32 = arith.constant 0 : i32
    %c0_i32_0 = arith.constant 0 : i32
    %c0_i32_1 = arith.constant 0 : i32
    return %c0_i32, %c0_i32_0 : i32, i32
  }
  func.func @transform_8(%arg0: i32) -> (i32, i32) {
    %c0_i32 = arith.constant 0 : i32
    %c0_i32_0 = arith.constant 0 : i32
    %c0_i32_1 = arith.constant 0 : i32
    return %c0_i32, %c0_i32_0 : i32, i32
  }
  func.func @transform_9(%arg0: i32) -> (i32, i32) {
    %c0_i32 = arith.constant 0 : i32
    %c0_i32_0 = arith.constant 0 : i32
    return %arg0, %c0_i32 : i32, i32
  }
}

</mosaic_0001>

<llo_original>
// kernel: tpu_custom_call.1
$region0: #{tpu_custom_call.1}
  #allocation0 [shape = 'u32[]', space=smem, size = 0x4, offset = 0x4, fixed_abs, tag = 'smem constant byte address 0x4 - core index']
  #allocation1 [shape = 'u32[144,128]{1,0:T(1,128)}', space=vmem, size = 0x12000, scoped, tag = 'internal scratch']
  #allocation2 [shape = 'f32[1,1]{1,0:T(1,128)S(1)}', space=vmem, size = 0x200, scoped, tag = 'scoped memory for tpu_custom_call.1']
  %s0 = inlined_call_operand.vmem [shape: bf16[128,12], index: 0, kind: input, shape index: {}]
  %s1 = inlined_call_operand.vmem [shape: bf16[128,4], index: 1, kind: input, shape index: {}]
  %s2 = inlined_call_operand.vmem [shape: bf16[12,32], index: 2, kind: input, shape index: {}]
  %s3 = inlined_call_operand.vmem [shape: bf16[4,32], index: 3, kind: input, shape index: {}]
  %s4 = inlined_call_operand.vmem [shape: f32[1,32], index: 4, kind: input, shape index: {}]
  %s5 = inlined_call_operand.vmem [shape: bf16[32,32], index: 5, kind: input, shape index: {}]
  %s6 = inlined_call_operand.vmem [shape: f32[1,32], index: 6, kind: input, shape index: {}]
  %s7 = inlined_call_operand.vmem [shape: f32[1,32], index: 7, kind: input, shape index: {}]
  %s8 = inlined_call_operand.<no memory space> [shape: f32[1,1], index: 8, kind: input, shape index: {}]
  %s9 = inlined_call_operand.hbm [shape: f32[1,128], index: 9, kind: output, shape index: {}]
  %s10 = sld [smem:[#allocation0]]
  $region46: #{tpu_custom_call.1} parent=0
    _
  %s12 = ssub.s32 1, %s10
  %s13 = scalar_select 0, %s12, %s10
  %v14 = vstv %s8
  %15 = vst [vmem:[#allocation2] sm:$0x1] %v14
  $region1: #{tpu_custom_call.1} parent=0
    #allocation3 [shape = 'u8[512]{0}', space=vmem, size = 0x400, scoped, tag = 'output window, operand 0, single buffered']
    #allocation4 [shape = 's32[1]{0}', space=sflag, size = 0x4, scoped, tag = 'scoped memory for tpu_custom_call.1']
    %16 = vsyncpa [#allocation4], 0
    // Predicated region
    $region2: #{tpu_custom_call.1} parent=1 // pred_check
      _
    $region3: #{tpu_custom_call.1} parent=1 // pred_check_branch
      %18 = sbr.rel (0) target = $region5
    $region4: #{tpu_custom_call.1} parent=1 // pred_region
      _
    $region5: #{tpu_custom_call.1} parent=1 // pred_fallthru
      _
    // Predicated region
    $region6: #{tpu_custom_call.1} parent=1 // pred_check
      _
    $region7: #{tpu_custom_call.1} parent=1 // pred_check_branch
      %20 = sbr.rel (0) target = $region9
    $region8: #{tpu_custom_call.1} parent=1 // pred_region
      _
    $region9: #{tpu_custom_call.1} parent=1 // pred_fallthru
      _
    // Predicated region
    $region10: #{tpu_custom_call.1} parent=1 // pred_check
      _
    $region11: #{tpu_custom_call.1} parent=1 // pred_check_branch
      %22 = sbr.rel (0) target = $region13
    $region12: #{tpu_custom_call.1} parent=1 // pred_region
      _
    $region13: #{tpu_custom_call.1} parent=1 // pred_fallthru
      _
    // Predicated region
    $region14: #{tpu_custom_call.1} parent=1 // pred_check
      _
    $region15: #{tpu_custom_call.1} parent=1 // pred_check_branch
      %24 = sbr.rel (0) target = $region17
    $region16: #{tpu_custom_call.1} parent=1 // pred_region
      _
    $region17: #{tpu_custom_call.1} parent=1 // pred_fallthru
      _
    // Predicated region
    $region18: #{tpu_custom_call.1} parent=1 // pred_check
      _
    $region19: #{tpu_custom_call.1} parent=1 // pred_check_branch
      %26 = sbr.rel (0) target = $region21
    $region20: #{tpu_custom_call.1} parent=1 // pred_region
      _
    $region21: #{tpu_custom_call.1} parent=1 // pred_fallthru
      _
    // Predicated region
    $region22: #{tpu_custom_call.1} parent=1 // pred_check
      _
    $region23: #{tpu_custom_call.1} parent=1 // pred_check_branch
      %28 = sbr.rel (0) target = $region25
    $region24: #{tpu_custom_call.1} parent=1 // pred_region
      _
    $region25: #{tpu_custom_call.1} parent=1 // pred_fallthru
      _
    // Predicated region
    $region26: #{tpu_custom_call.1} parent=1 // pred_check
      _
    $region27: #{tpu_custom_call.1} parent=1 // pred_check_branch
      %30 = sbr.rel (0) target = $region29
    $region28: #{tpu_custom_call.1} parent=1 // pred_region
      _
    $region29: #{tpu_custom_call.1} parent=1 // pred_fallthru
      _
    // Predicated region
    $region30: #{tpu_custom_call.1} parent=1 // pred_check
      _
    $region31: #{tpu_custom_call.1} parent=1 // pred_check_branch
      %32 = sbr.rel (0) target = $region33
    $region32: #{tpu_custom_call.1} parent=1 // pred_region
      _
    $region33: #{tpu_custom_call.1} parent=1 // pred_fallthru
      _
    // Predicated region
    $region34: #{tpu_custom_call.1} parent=1 // pred_check
      _
    $region35: #{tpu_custom_call.1} parent=1 // pred_check_branch
      %34 = sbr.rel (0) target = $region37
    $region36: #{tpu_custom_call.1} parent=1 // pred_region
      _
    $region37: #{tpu_custom_call.1} parent=1 // pred_fallthru
      _
    %v36 = vld [vmem:[%s0] sm:$0xf]
    %v37 = vld [vmem:[%s0 + $0x4] sm:$0xf]
    %v38 = vld [vmem:[%s0 + $0x8] sm:$0xf]
    %v39 = vld [vmem:[%s0 + $0xc] sm:$0xf]
    %v40 = vld [vmem:[%s0 + $0x10] sm:$0xf]
    %v41 = vld [vmem:[%s0 + $0x14] sm:$0xf]
    %v42 = vld [vmem:[%s0 + $0x18] sm:$0xf]
    %v43 = vld [vmem:[%s0 + $0x1c] sm:$0xf]
    %v44 = vld [vmem:[%s0 + $0x20] sm:$0xf]
    %v45 = vld [vmem:[%s0 + $0x24] sm:$0xf]
    %v46 = vld [vmem:[%s0 + $0x28] sm:$0xf]
    %v47 = vld [vmem:[%s0 + $0x2c] sm:$0xf]
    %v48 = vld [vmem:[%s0 + $0x30] sm:$0xf]
    %v49 = vld [vmem:[%s0 + $0x34] sm:$0xf]
    %v50 = vld [vmem:[%s0 + $0x38] sm:$0xf]
    %v51 = vld [vmem:[%s0 + $0x3c] sm:$0xf]
    %v52 = vld [vmem:[%s2] sm:$0xf]
    %v53 = vld [vmem:[%s2 + $0x4] sm:$0x3]
    %v54 = vld [vmem:[%s1] sm:$0xf]
    %v55 = vld [vmem:[%s1 + $0x4] sm:$0xf]
    %v56 = vld [vmem:[%s1 + $0x8] sm:$0xf]
    %v57 = vld [vmem:[%s1 + $0xc] sm:$0xf]
    %v58 = vld [vmem:[%s1 + $0x10] sm:$0xf]
    %v59 = vld [vmem:[%s1 + $0x14] sm:$0xf]
    %v60 = vld [vmem:[%s1 + $0x18] sm:$0xf]
    %v61 = vld [vmem:[%s1 + $0x1c] sm:$0xf]
    %v62 = vld [vmem:[%s1 + $0x20] sm:$0xf]
    %v63 = vld [vmem:[%s1 + $0x24] sm:$0xf]
    %v64 = vld [vmem:[%s1 + $0x28] sm:$0xf]
    %v65 = vld [vmem:[%s1 + $0x2c] sm:$0xf]
    %v66 = vld [vmem:[%s1 + $0x30] sm:$0xf]
    %v67 = vld [vmem:[%s1 + $0x34] sm:$0xf]
    %v68 = vld [vmem:[%s1 + $0x38] sm:$0xf]
    %v69 = vld [vmem:[%s1 + $0x3c] sm:$0xf]
    %v70 = vld [vmem:[%s3] sm:$0x3]
    %v87 = vunpack.c.l.b16 %v54
    %v88 = vunpack.c.l.b16 %v55
    %v89 = vunpack.c.l.b16 %v56
    %v90 = vunpack.c.l.b16 %v57
    %v91 = vunpack.c.l.b16 %v58
    %v92 = vunpack.c.l.b16 %v59
    %v93 = vunpack.c.l.b16 %v60
    %v94 = vunpack.c.l.b16 %v61
    %v95 = vunpack.c.l.b16 %v62
    %v96 = vunpack.c.l.b16 %v63
    %v97 = vunpack.c.l.b16 %v64
    %v98 = vunpack.c.l.b16 %v65
    %v99 = vunpack.c.l.b16 %v66
    %v100 = vunpack.c.l.b16 %v67
    %v101 = vunpack.c.l.b16 %v68
    %v102 = vunpack.c.l.b16 %v69
    %v103 = vpack.c.b16 %v88, %v87
    %v104 = vpack.c.b16 %v90, %v89
    %v105 = vpack.c.b16 %v92, %v91
    %v106 = vpack.c.b16 %v94, %v93
    %v107 = vpack.c.b16 %v96, %v95
    %v108 = vpack.c.b16 %v98, %v97
    %v109 = vpack.c.b16 %v100, %v99
    %v110 = vpack.c.b16 %v102, %v101
    %vm111 = vcmask 31744
    %v113 = vsel %vm111, %v103, 0
    %v116 = vsel %vm111, %v104, 0
    %v119 = vsel %vm111, %v105, 0
    %v122 = vsel %vm111, %v106, 0
    %v125 = vsel %vm111, %v107, 0
    %v128 = vsel %vm111, %v108, 0
    %v131 = vsel %vm111, %v109, 0
    %v134 = vsel %vm111, %v110, 0
    %vm136 = vcmask 1041408
    %v138 = vsel %vm136, %v70, 0
    %140 = vmatprep.subr.bf16.mxu0 0
    %141 = vmatpush1.bf16.msra.mxu0 0
    %142 = vmatprep.subr.bf16.mxu0 0
    %143 = vmatpush1.bf16.msra.mxu0 0
    %144 = vmatprep.subr.bf16.mxu0 0
    %145 = vmatpush1.bf16.msra.mxu0 0
    %146 = vmatprep.subr.bf16.mxu0 0
    %147 = vmatpush1.bf16.msra.mxu0 0
    %148 = vmatprep.subr.bf16.mxu0 0
    %149 = vmatpush1.bf16.msra.mxu0 0
    %150 = vmatprep.subr.bf16.mxu0 0
    %151 = vmatpush1.bf16.msra.mxu0 0
    %152 = vmatprep.subr.bf16.mxu0 0
    %153 = vmatpush1.bf16.msra.mxu0 0
    %154 = vmatprep.subr.bf16.mxu0 0
    %155 = vmatpush1.bf16.msra.mxu0 %v138
    %156 = vmatprep.subr.bf16.mxu0 0
    %157 = vmatpush2.bf16.msra.mxu0 0
    %158 = vmatprep.subr.bf16.mxu0 0
    %159 = vmatpush2.bf16.msra.mxu0 0
    %160 = vmatprep.subr.bf16.mxu0 0
    %161 = vmatpush2.bf16.msra.mxu0 0
    %162 = vmatprep.subr.bf16.mxu0 0
    %163 = vmatpush2.bf16.msra.mxu0 0
    %164 = vmatprep.subr.bf16.mxu0 0
    %165 = vmatpush2.bf16.msra.mxu0 0
    %166 = vmatprep.subr.bf16.mxu0 0
    %167 = vmatpush2.bf16.msra.mxu0 0
    %168 = vmatprep.subr.bf16.mxu0 0
    %169 = vmatpush2.bf16.msra.mxu0 0
    %170 = vmatprep.subr.bf16.mxu0 0
    %171 = vmatpush2.bf16.msra.mxu0 0
    %172 = vmatprep.mubr.bf16.mxu0 0
    %173 = vmatmul.mubr.bf16.gmra.mxu0 %v113
    %v174 = vpop.f32.mrf.mxu0
    %v175 = vadd.f32 0.0, %v174
    %v176 = vpop.f32.mrf.mxu0
    %v177 = vpop.f32.mrf.mxu0
    %v178 = vadd.f32 0.0, %v177
    %v179 = vpop.f32.mrf.mxu0
    %180 = vmatprep.mubr.bf16.mxu0 0
    %181 = vmatmul.mubr.bf16.gmra.mxu0 %v116
    %v182 = vpop.f32.mrf.mxu0
    %v183 = vadd.f32 0.0, %v182
    %v184 = vpop.f32.mrf.mxu0
    %v185 = vpop.f32.mrf.mxu0
    %v186 = vadd.f32 0.0, %v185
    %v187 = vpop.f32.mrf.mxu0
    %188 = vmatprep.mubr.bf16.mxu0 0
    %189 = vmatmul.mubr.bf16.gmra.mxu0 %v119
    %v190 = vpop.f32.mrf.mxu0
    %v191 = vadd.f32 0.0, %v190
    %v192 = vpop.f32.mrf.mxu0
    %v193 = vpop.f32.mrf.mxu0
    %v194 = vadd.f32 0.0, %v193
    %v195 = vpop.f32.mrf.mxu0
    %196 = vmatprep.mubr.bf16.mxu0 0
    %197 = vmatmul.mubr.bf16.gmra.mxu0 %v122
    %v198 = vpop.f32.mrf.mxu0
    %v199 = vadd.f32 0.0, %v198
    %v200 = vpop.f32.mrf.mxu0
    %v201 = vpop.f32.mrf.mxu0
    %v202 = vadd.f32 0.0, %v201
    %v203 = vpop.f32.mrf.mxu0
    %204 = vmatprep.mubr.bf16.mxu0 0
    %205 = vmatmul.mubr.bf16.gmra.mxu0 %v125
    %v206 = vpop.f32.mrf.mxu0
    %v207 = vadd.f32 0.0, %v206
    %v208 = vpop.f32.mrf.mxu0
    %v209 = vpop.f32.mrf.mxu0
    %v210 = vadd.f32 0.0, %v209
    %v211 = vpop.f32.mrf.mxu0
    %212 = vmatprep.mubr.bf16.mxu0 0
    %213 = vmatmul.mubr.bf16.gmra.mxu0 %v128
    %v214 = vpop.f32.mrf.mxu0
    %v215 = vadd.f32 0.0, %v214
    %v216 = vpop.f32.mrf.mxu0
    %v217 = vpop.f32.mrf.mxu0
    %v218 = vadd.f32 0.0, %v217
    %v219 = vpop.f32.mrf.mxu0
    %220 = vmatprep.mubr.bf16.mxu0 0
    %221 = vmatmul.mubr.bf16.gmra.mxu0 %v131
    %v222 = vpop.f32.mrf.mxu0
    %v223 = vadd.f32 0.0, %v222
    %v224 = vpop.f32.mrf.mxu0
    %v225 = vpop.f32.mrf.mxu0
    %v226 = vadd.f32 0.0, %v225
    %v227 = vpop.f32.mrf.mxu0
    %228 = vmatprep.mubr.bf16.mxu0 0
    %229 = vmatmul.mubr.bf16.gmra.mxu0 %v134
    %v230 = vpop.f32.mrf.mxu0
    %v231 = vadd.f32 0.0, %v230
    %v232 = vpop.f32.mrf.mxu0
    %v233 = vpop.f32.mrf.mxu0
    %v234 = vadd.f32 0.0, %v233
    %v235 = vpop.f32.mrf.mxu0
    %236 = vdwg.mxu0
    %v253 = vunpack.c.l.b16 %v36
    %v254 = vunpack.c.l.b16 %v37
    %v255 = vunpack.c.l.b16 %v38
    %v256 = vunpack.c.l.b16 %v39
    %v257 = vunpack.c.l.b16 %v40
    %v258 = vunpack.c.l.b16 %v41
    %v259 = vunpack.c.l.b16 %v42
    %v260 = vunpack.c.l.b16 %v43
    %v261 = vunpack.c.l.b16 %v44
    %v262 = vunpack.c.l.b16 %v45
    %v263 = vunpack.c.l.b16 %v46
    %v264 = vunpack.c.l.b16 %v47
    %v265 = vunpack.c.l.b16 %v48
    %v266 = vunpack.c.l.b16 %v49
    %v267 = vunpack.c.l.b16 %v50
    %v268 = vunpack.c.l.b16 %v51
    %v269 = vpack.c.b16 %v254, %v253
    %v270 = vpack.c.b16 %v256, %v255
    %v271 = vpack.c.b16 %v258, %v257
    %v272 = vpack.c.b16 %v260, %v259
    %v273 = vpack.c.b16 %v262, %v261
    %v274 = vpack.c.b16 %v264, %v263
    %v275 = vpack.c.b16 %v266, %v265
    %v276 = vpack.c.b16 %v268, %v267
    %v279 = vunpack.c.l.b16 %v52
    %v280 = vunpack.c.l.b16 %v53
    %v281 = vpack.c.b16 %v280, %v279
    %vm282 = vcmask 97280
    %v284 = vsel %vm282, %v269, 0
    %v287 = vsel %vm282, %v270, 0
    %v290 = vsel %vm282, %v271, 0
    %v293 = vsel %vm282, %v272, 0
    %v296 = vsel %vm282, %v273, 0
    %v299 = vsel %vm282, %v274, 0
    %v302 = vsel %vm282, %v275, 0
    %v305 = vsel %vm282, %v276, 0
    %vm307 = vcmask 1045504
    %v309 = vsel %vm307, %v281, 0
    %311 = vmatprep.subr.bf16.mxu0 0
    %312 = vmatpush1.bf16.msra.mxu0 0
    %313 = vmatprep.subr.bf16.mxu0 0
    %314 = vmatpush1.bf16.msra.mxu0 0
    %315 = vmatprep.subr.bf16.mxu0 0
    %316 = vmatpush1.bf16.msra.mxu0 0
    %317 = vmatprep.subr.bf16.mxu0 0
    %318 = vmatpush1.bf16.msra.mxu0 0
    %319 = vmatprep.subr.bf16.mxu0 0
    %320 = vmatpush1.bf16.msra.mxu0 0
    %321 = vmatprep.subr.bf16.mxu0 0
    %322 = vmatpush1.bf16.msra.mxu0 0
    %323 = vmatprep.subr.bf16.mxu0 0
    %324 = vmatpush1.bf16.msra.mxu0 0
    %325 = vmatprep.subr.bf16.mxu0 0
    %326 = vmatpush1.bf16.msra.mxu0 %v309
    %327 = vmatprep.subr.bf16.mxu0 0
    %328 = vmatpush2.bf16.msra.mxu0 0
    %329 = vmatprep.subr.bf16.mxu0 0
    %330 = vmatpush2.bf16.msra.mxu0 0
    %331 = vmatprep.subr.bf16.mxu0 0
    %332 = vmatpush2.bf16.msra.mxu0 0
    %333 = vmatprep.subr.bf16.mxu0 0
    %334 = vmatpush2.bf16.msra.mxu0 0
    %335 = vmatprep.subr.bf16.mxu0 0
    %336 = vmatpush2.bf16.msra.mxu0 0
    %337 = vmatprep.subr.bf16.mxu0 0
    %338 = vmatpush2.bf16.msra.mxu0 0
    %339 = vmatprep.subr.bf16.mxu0 0
    %340 = vmatpush2.bf16.msra.mxu0 0
    %341 = vmatprep.subr.bf16.mxu0 0
    %342 = vmatpush2.bf16.msra.mxu0 0
    %343 = vmatprep.mubr.bf16.mxu0 0
    %344 = vmatmul.mubr.bf16.gmra.mxu0 %v284
    %v345 = vpop.f32.mrf.mxu0
    %v346 = vadd.f32 %v175, %v345
    %v347 = vpop.f32.mrf.mxu0
    %v348 = vpop.f32.mrf.mxu0
    %v349 = vadd.f32 %v178, %v348
    %v350 = vpop.f32.mrf.mxu0
    %351 = vmatprep.mubr.bf16.mxu0 0
    %352 = vmatmul.mubr.bf16.gmra.mxu0 %v287
    %v353 = vpop.f32.mrf.mxu0
    %v354 = vadd.f32 %v183, %v353
    %v355 = vpop.f32.mrf.mxu0
    %v356 = vpop.f32.mrf.mxu0
    %v357 = vadd.f32 %v186, %v356
    %v358 = vpop.f32.mrf.mxu0
    %359 = vmatprep.mubr.bf16.mxu0 0
    %360 = vmatmul.mubr.bf16.gmra.mxu0 %v290
    %v361 = vpop.f32.mrf.mxu0
    %v362 = vadd.f32 %v191, %v361
    %v363 = vpop.f32.mrf.mxu0
    %v364 = vpop.f32.mrf.mxu0
    %v365 = vadd.f32 %v194, %v364
    %v366 = vpop.f32.mrf.mxu0
    %367 = vmatprep.mubr.bf16.mxu0 0
    %368 = vmatmul.mubr.bf16.gmra.mxu0 %v293
    %v369 = vpop.f32.mrf.mxu0
    %v370 = vadd.f32 %v199, %v369
    %v371 = vpop.f32.mrf.mxu0
    %v372 = vpop.f32.mrf.mxu0
    %v373 = vadd.f32 %v202, %v372
    %v374 = vpop.f32.mrf.mxu0
    %375 = vmatprep.mubr.bf16.mxu0 0
    %376 = vmatmul.mubr.bf16.gmra.mxu0 %v296
    %v377 = vpop.f32.mrf.mxu0
    %v378 = vadd.f32 %v207, %v377
    %v379 = vpop.f32.mrf.mxu0
    %v380 = vpop.f32.mrf.mxu0
    %v381 = vadd.f32 %v210, %v380
    %v382 = vpop.f32.mrf.mxu0
    %383 = vmatprep.mubr.bf16.mxu0 0
    %384 = vmatmul.mubr.bf16.gmra.mxu0 %v299
    %v385 = vpop.f32.mrf.mxu0
    %v386 = vadd.f32 %v215, %v385
    %v387 = vpop.f32.mrf.mxu0
    %v388 = vpop.f32.mrf.mxu0
    %v389 = vadd.f32 %v218, %v388
    %v390 = vpop.f32.mrf.mxu0
    %391 = vmatprep.mubr.bf16.mxu0 0
    %392 = vmatmul.mubr.bf16.gmra.mxu0 %v302
    %v393 = vpop.f32.mrf.mxu0
    %v394 = vadd.f32 %v223, %v393
    %v395 = vpop.f32.mrf.mxu0
    %v396 = vpop.f32.mrf.mxu0
    %v397 = vadd.f32 %v226, %v396
    %v398 = vpop.f32.mrf.mxu0
    %399 = vmatprep.mubr.bf16.mxu0 0
    %400 = vmatmul.mubr.bf16.gmra.mxu0 %v305
    %v401 = vpop.f32.mrf.mxu0
    %v402 = vadd.f32 %v231, %v401
    %v403 = vpop.f32.mrf.mxu0
    %v404 = vpop.f32.mrf.mxu0
    %v405 = vadd.f32 %v234, %v404
    %v406 = vpop.f32.mrf.mxu0
    %407 = vdwg.mxu0
    %v408 = vld [vmem:[%s4] sm:$0x1]
    %v410 = vlaneseq
    %v411 = vshrl.u32 %v410, 7
    %v412 = vsub.s32 0, %v411
    %v413 = vrot.slane %v408, %v412
    %v415 = vadd.f32 %v346, %v413
    %v416 = vadd.f32 %v349, %v413
    %v417 = vadd.f32 %v354, %v413
    %v418 = vadd.f32 %v357, %v413
    %v419 = vadd.f32 %v362, %v413
    %v420 = vadd.f32 %v365, %v413
    %v421 = vadd.f32 %v370, %v413
    %v422 = vadd.f32 %v373, %v413
    %v423 = vadd.f32 %v378, %v413
    %v424 = vadd.f32 %v381, %v413
    %v425 = vadd.f32 %v386, %v413
    %v426 = vadd.f32 %v389, %v413
    %v427 = vadd.f32 %v394, %v413
    %v428 = vadd.f32 %v397, %v413
    %v429 = vadd.f32 %v402, %v413
    %v430 = vadd.f32 %v405, %v413
    %v431 = vmax.f32 %v415, 0.0
    %v432 = vmax.f32 %v416, 0.0
    %v433 = vmax.f32 %v417, 0.0
    %v434 = vmax.f32 %v418, 0.0
    %v435 = vmax.f32 %v419, 0.0
    %v436 = vmax.f32 %v420, 0.0
    %v437 = vmax.f32 %v421, 0.0
    %v438 = vmax.f32 %v422, 0.0
    %v439 = vmax.f32 %v423, 0.0
    %v440 = vmax.f32 %v424, 0.0
    %v441 = vmax.f32 %v425, 0.0
    %v442 = vmax.f32 %v426, 0.0
    %v443 = vmax.f32 %v427, 0.0
    %v444 = vmax.f32 %v428, 0.0
    %v445 = vmax.f32 %v429, 0.0
    %v446 = vmax.f32 %v430, 0.0
    %v447 = vpack.c.bf16 %v432, %v431
    %v448 = vpack.c.bf16 %v434, %v433
    %v449 = vpack.c.bf16 %v436, %v435
    %v450 = vpack.c.bf16 %v438, %v437
    %v451 = vpack.c.bf16 %v440, %v439
    %v452 = vpack.c.bf16 %v442, %v441
    %v453 = vpack.c.bf16 %v444, %v443
    %v454 = vpack.c.bf16 %v446, %v445
    %v455 = vld [vmem:[%s5] sm:$0xf]
    %v456 = vld [vmem:[%s5 + $0x4] sm:$0xf]
    %v457 = vld [vmem:[%s5 + $0x8] sm:$0xf]
    %v458 = vld [vmem:[%s5 + $0xc] sm:$0xf]
    %v459 = vld [vmem:[%s6] sm:$0x1]
    %v461 = vlaneseq
    %v462 = vshrl.u32 %v461, 7
    %v463 = vsub.s32 0, %v462
    %v464 = vrot.slane %v459, %v463
    %v470 = vunpack.c.l.b16 %v455
    %v471 = vunpack.c.l.b16 %v456
    %v472 = vunpack.c.l.b16 %v457
    %v473 = vunpack.c.l.b16 %v458
    %v474 = vpack.c.b16 %v471, %v470
    %v475 = vpack.c.b16 %v473, %v472
    %vm478 = vcmask 261120
    %v480 = vsel %vm478, %v447, 0
    %v483 = vsel %vm478, %v448, 0
    %v486 = vsel %vm478, %v449, 0
    %v489 = vsel %vm478, %v450, 0
    %v492 = vsel %vm478, %v451, 0
    %v495 = vsel %vm478, %v452, 0
    %v498 = vsel %vm478, %v453, 0
    %v501 = vsel %vm478, %v454, 0
    %503 = vmatprep.subr.bf16.mxu0 0
    %504 = vmatpush1.bf16.msra.mxu0 0
    %505 = vmatprep.subr.bf16.mxu0 0
    %506 = vmatpush1.bf16.msra.mxu0 0
    %507 = vmatprep.subr.bf16.mxu0 0
    %508 = vmatpush1.bf16.msra.mxu0 0
    %509 = vmatprep.subr.bf16.mxu0 0
    %510 = vmatpush1.bf16.msra.mxu0 0
    %511 = vmatprep.subr.bf16.mxu0 0
    %512 = vmatpush1.bf16.msra.mxu0 0
    %513 = vmatprep.subr.bf16.mxu0 0
    %514 = vmatpush1.bf16.msra.mxu0 0
    %515 = vmatprep.subr.bf16.mxu0 0
    %516 = vmatpush1.bf16.msra.mxu0 %v475
    %517 = vmatprep.subr.bf16.mxu0 0
    %518 = vmatpush1.bf16.msra.mxu0 %v474
    %519 = vmatprep.subr.bf16.mxu0 0
    %520 = vmatpush2.bf16.msra.mxu0 0
    %521 = vmatprep.subr.bf16.mxu0 0
    %522 = vmatpush2.bf16.msra.mxu0 0
    %523 = vmatprep.subr.bf16.mxu0 0
    %524 = vmatpush2.bf16.msra.mxu0 0
    %525 = vmatprep.subr.bf16.mxu0 0
    %526 = vmatpush2.bf16.msra.mxu0 0
    %527 = vmatprep.subr.bf16.mxu0 0
    %528 = vmatpush2.bf16.msra.mxu0 0
    %529 = vmatprep.subr.bf16.mxu0 0
    %530 = vmatpush2.bf16.msra.mxu0 0
    %531 = vmatprep.subr.bf16.mxu0 0
    %532 = vmatpush2.bf16.msra.mxu0 0
    %533 = vmatprep.subr.bf16.mxu0 0
    %534 = vmatpush2.bf16.msra.mxu0 0
    %535 = vmatprep.mubr.bf16.mxu0 0
    %536 = vmatmul.mubr.bf16.gmra.mxu0 %v480
    %v537 = vpop.f32.mrf.mxu0
    %v538 = vadd.f32 %v464, %v537
    %v539 = vpop.f32.mrf.mxu0
    %v540 = vpop.f32.mrf.mxu0
    %v541 = vadd.f32 %v464, %v540
    %v542 = vpop.f32.mrf.mxu0
    %543 = vmatprep.mubr.bf16.mxu0 0
    %544 = vmatmul.mubr.bf16.gmra.mxu0 %v483
    %v545 = vpop.f32.mrf.mxu0
    %v546 = vadd.f32 %v464, %v545
    %v547 = vpop.f32.mrf.mxu0
    %v548 = vpop.f32.mrf.mxu0
    %v549 = vadd.f32 %v464, %v548
    %v550 = vpop.f32.mrf.mxu0
    %551 = vmatprep.mubr.bf16.mxu0 0
    %552 = vmatmul.mubr.bf16.gmra.mxu0 %v486
    %v553 = vpop.f32.mrf.mxu0
    %v554 = vadd.f32 %v464, %v553
    %v555 = vpop.f32.mrf.mxu0
    %v556 = vpop.f32.mrf.mxu0
    %v557 = vadd.f32 %v464, %v556
    %v558 = vpop.f32.mrf.mxu0
    %559 = vmatprep.mubr.bf16.mxu0 0
    %560 = vmatmul.mubr.bf16.gmra.mxu0 %v489
    %v561 = vpop.f32.mrf.mxu0
    %v562 = vadd.f32 %v464, %v561
    %v563 = vpop.f32.mrf.mxu0
    %v564 = vpop.f32.mrf.mxu0
    %v565 = vadd.f32 %v464, %v564
    %v566 = vpop.f32.mrf.mxu0
    %567 = vmatprep.mubr.bf16.mxu0 0
    %568 = vmatmul.mubr.bf16.gmra.mxu0 %v492
    %v569 = vpop.f32.mrf.mxu0
    %v570 = vadd.f32 %v464, %v569
    %v571 = vpop.f32.mrf.mxu0
    %v572 = vpop.f32.mrf.mxu0
    %v573 = vadd.f32 %v464, %v572
    %v574 = vpop.f32.mrf.mxu0
    %575 = vmatprep.mubr.bf16.mxu0 0
    %576 = vmatmul.mubr.bf16.gmra.mxu0 %v495
    %v577 = vpop.f32.mrf.mxu0
    %v578 = vadd.f32 %v464, %v577
    %v579 = vpop.f32.mrf.mxu0
    %v580 = vpop.f32.mrf.mxu0
    %v581 = vadd.f32 %v464, %v580
    %v582 = vpop.f32.mrf.mxu0
    %583 = vmatprep.mubr.bf16.mxu0 0
    %584 = vmatmul.mubr.bf16.gmra.mxu0 %v498
    %v585 = vpop.f32.mrf.mxu0
    %v586 = vadd.f32 %v464, %v585
    %v587 = vpop.f32.mrf.mxu0
    %v588 = vpop.f32.mrf.mxu0
    %v589 = vadd.f32 %v464, %v588
    %v590 = vpop.f32.mrf.mxu0
    %591 = vmatprep.mubr.bf16.mxu0 0
    %592 = vmatmul.mubr.bf16.gmra.mxu0 %v501
    %v593 = vpop.f32.mrf.mxu0
    %v594 = vadd.f32 %v464, %v593
    %v595 = vpop.f32.mrf.mxu0
    %v596 = vpop.f32.mrf.mxu0
    %v597 = vadd.f32 %v464, %v596
    %v598 = vpop.f32.mrf.mxu0
    %599 = vdwg.mxu0
    %v600 = vmax.f32 %v538, 0.0
    %v601 = vmax.f32 %v541, 0.0
    %v602 = vmax.f32 %v546, 0.0
    %v603 = vmax.f32 %v549, 0.0
    %v604 = vmax.f32 %v554, 0.0
    %v605 = vmax.f32 %v557, 0.0
    %v606 = vmax.f32 %v562, 0.0
    %v607 = vmax.f32 %v565, 0.0
    %v608 = vmax.f32 %v570, 0.0
    %v609 = vmax.f32 %v573, 0.0
    %v610 = vmax.f32 %v578, 0.0
    %v611 = vmax.f32 %v581, 0.0
    %v612 = vmax.f32 %v586, 0.0
    %v613 = vmax.f32 %v589, 0.0
    %v614 = vmax.f32 %v594, 0.0
    %v615 = vmax.f32 %v597, 0.0
    %v616 = vld [vmem:[%s7] sm:$0x1]
    %v618 = vlaneseq
    %v619 = vshrl.u32 %v618, 7
    %v620 = vsub.s32 0, %v619
    %v621 = vrot.slane %v616, %v620
    %v623 = vmul.f32 %v600, %v621
    %v624 = vmul.f32 %v601, %v621
    %v625 = vmul.f32 %v602, %v621
    %v626 = vmul.f32 %v603, %v621
    %v627 = vmul.f32 %v604, %v621
    %v628 = vmul.f32 %v605, %v621
    %v629 = vmul.f32 %v606, %v621
    %v630 = vmul.f32 %v607, %v621
    %v631 = vmul.f32 %v608, %v621
    %v632 = vmul.f32 %v609, %v621
    %v633 = vmul.f32 %v610, %v621
    %v634 = vmul.f32 %v611, %v621
    %v635 = vmul.f32 %v612, %v621
    %v636 = vmul.f32 %v613, %v621
    %v637 = vmul.f32 %v614, %v621
    %v638 = vmul.f32 %v615, %v621
    %v639 = vsel %vm478, %v623, 0.0
    %640 = vadd.xlane.f32.xlu0 %v639
    %v641 = vpop.xlane.xlu0 %640
    %v642 = vsel %vm478, %v624, 0.0
    %643 = vadd.xlane.f32.xlu0 %v642
    %v644 = vpop.xlane.xlu0 %643
    %v645 = vsel %vm478, %v625, 0.0
    %646 = vadd.xlane.f32.xlu0 %v645
    %v647 = vpop.xlane.xlu0 %646
    %v648 = vsel %vm478, %v626, 0.0
    %649 = vadd.xlane.f32.xlu0 %v648
    %v650 = vpop.xlane.xlu0 %649
    %v651 = vsel %vm478, %v627, 0.0
    %652 = vadd.xlane.f32.xlu0 %v651
    %v653 = vpop.xlane.xlu0 %652
    %v654 = vsel %vm478, %v628, 0.0
    %655 = vadd.xlane.f32.xlu0 %v654
    %v656 = vpop.xlane.xlu0 %655
    %v657 = vsel %vm478, %v629, 0.0
    %658 = vadd.xlane.f32.xlu0 %v657
    %v659 = vpop.xlane.xlu0 %658
    %v660 = vsel %vm478, %v630, 0.0
    %661 = vadd.xlane.f32.xlu0 %v660
    %v662 = vpop.xlane.xlu0 %661
    %v663 = vsel %vm478, %v631, 0.0
    %664 = vadd.xlane.f32.xlu0 %v663
    %v665 = vpop.xlane.xlu0 %664
    %v666 = vsel %vm478, %v632, 0.0
    %667 = vadd.xlane.f32.xlu0 %v666
    %v668 = vpop.xlane.xlu0 %667
    %v669 = vsel %vm478, %v633, 0.0
    %670 = vadd.xlane.f32.xlu0 %v669
    %v671 = vpop.xlane.xlu0 %670
    %v672 = vsel %vm478, %v634, 0.0
    %673 = vadd.xlane.f32.xlu0 %v672
    %v674 = vpop.xlane.xlu0 %673
    %v675 = vsel %vm478, %v635, 0.0
    %676 = vadd.xlane.f32.xlu0 %v675
    %v677 = vpop.xlane.xlu0 %676
    %v678 = vsel %vm478, %v636, 0.0
    %679 = vadd.xlane.f32.xlu0 %v678
    %v680 = vpop.xlane.xlu0 %679
    %v681 = vsel %vm478, %v637, 0.0
    %682 = vadd.xlane.f32.xlu0 %v681
    %v683 = vpop.xlane.xlu0 %682
    %v684 = vsel %vm478, %v638, 0.0
    %685 = vadd.xlane.f32.xlu0 %v684
    %v686 = vpop.xlane.xlu0 %685
    %v687 = vld [vmem:[#allocation2] sm:$0x1]
    %v689 = vlaneseq
    %v690 = vshrl.u32 %v689, 7
    %v691 = vsub.s32 0, %v690
    %v692 = vrot.slane %v687, %v691
    %v694 = vadd.f32 %v641, %v692
    %v695 = vadd.f32 %v644, %v692
    %v696 = vadd.f32 %v647, %v692
    %v697 = vadd.f32 %v650, %v692
    %v698 = vadd.f32 %v653, %v692
    %v699 = vadd.f32 %v656, %v692
    %v700 = vadd.f32 %v659, %v692
    %v701 = vadd.f32 %v662, %v692
    %v702 = vadd.f32 %v665, %v692
    %v703 = vadd.f32 %v668, %v692
    %v704 = vadd.f32 %v671, %v692
    %v705 = vadd.f32 %v674, %v692
    %v706 = vadd.f32 %v677, %v692
    %v707 = vadd.f32 %v680, %v692
    %v708 = vadd.f32 %v683, %v692
    %v709 = vadd.f32 %v686, %v692
    %726 = vset.pattern.permute.xlu0 0
    %727 = vperm.xlu0 %726, %v694
    %v728 = vpop.permute.xlu0 %727
    %729 = vset.pattern.permute.xlu0 0
    %730 = vperm.xlu0 %729, %v695
    %v731 = vpop.permute.xlu0 %730
    %732 = vset.pattern.permute.xlu0 0
    %733 = vperm.xlu0 %732, %v696
    %v734 = vpop.permute.xlu0 %733
    %735 = vset.pattern.permute.xlu0 0
    %736 = vperm.xlu0 %735, %v697
    %v737 = vpop.permute.xlu0 %736
    %738 = vset.pattern.permute.xlu0 0
    %739 = vperm.xlu0 %738, %v698
    %v740 = vpop.permute.xlu0 %739
    %741 = vset.pattern.permute.xlu0 0
    %742 = vperm.xlu0 %741, %v699
    %v743 = vpop.permute.xlu0 %742
    %744 = vset.pattern.permute.xlu0 0
    %745 = vperm.xlu0 %744, %v700
    %v746 = vpop.permute.xlu0 %745
    %747 = vset.pattern.permute.xlu0 0
    %748 = vperm.xlu0 %747, %v701
    %v749 = vpop.permute.xlu0 %748
    %750 = vset.pattern.permute.xlu0 0
    %751 = vperm.xlu0 %750, %v702
    %v752 = vpop.permute.xlu0 %751
    %753 = vset.pattern.permute.xlu0 0
    %754 = vperm.xlu0 %753, %v703
    %v755 = vpop.permute.xlu0 %754
    %756 = vset.pattern.permute.xlu0 0
    %757 = vperm.xlu0 %756, %v704
    %v758 = vpop.permute.xlu0 %757
    %759 = vset.pattern.permute.xlu0 0
    %760 = vperm.xlu0 %759, %v705
    %v761 = vpop.permute.xlu0 %760
    %762 = vset.pattern.permute.xlu0 0
    %763 = vperm.xlu0 %762, %v706
    %v764 = vpop.permute.xlu0 %763
    %765 = vset.pattern.permute.xlu0 0
    %766 = vperm.xlu0 %765, %v707
    %v767 = vpop.permute.xlu0 %766
    %768 = vset.pattern.permute.xlu0 0
    %769 = vperm.xlu0 %768, %v708
    %v770 = vpop.permute.xlu0 %769
    %771 = vset.pattern.permute.xlu0 0
    %772 = vperm.xlu0 %771, %v709
    %v773 = vpop.permute.xlu0 %772
    %v774 = vlaneseq
    %v775 = vand.u32 %v774, 127
    %v776 = vlaneseq
    %v777 = vshrl.u32 %v776, 7
    %v778 = vsub.s32 %v775, %v777
    %v779 = vrot.slane %v728, %v778
    %v780 = vadd.s32 %v775, 4294967288
    %v781 = vlaneseq
    %v782 = vshrl.u32 %v781, 7
    %v783 = vsub.s32 %v780, %v782
    %v784 = vrot.slane %v731, %v783
    %vm785 = vcmask 130112
    %v786 = vsel %vm785, %v784, %v779
    %v787 = vadd.s32 %v775, 4294967280
    %v788 = vlaneseq
    %v789 = vshrl.u32 %v788, 7
    %v790 = vsub.s32 %v787, %v789
    %v791 = vrot.slane %v734, %v790
    %vm792 = vcmask 195712
    %v793 = vsel %vm792, %v791, %v786
    %v794 = vadd.s32 %v775, 4294967272
    %v795 = vlaneseq
    %v796 = vshrl.u32 %v795, 7
    %v797 = vsub.s32 %v794, %v796
    %v798 = vrot.slane %v737, %v797
    %vm799 = vcmask 261312
    %v800 = vsel %vm799, %v798, %v793
    %v801 = vadd.s32 %v775, 4294967264
    %v802 = vlaneseq
    %v803 = vshrl.u32 %v802, 7
    %v804 = vsub.s32 %v801, %v803
    %v805 = vrot.slane %v740, %v804
    %vm806 = vcmask 326912
    %v807 = vsel %vm806, %v805, %v800
    %v808 = vadd.s32 %v775, 4294967256
    %v809 = vlaneseq
    %v810 = vshrl.u32 %v809, 7
    %v811 = vsub.s32 %v808, %v810
    %v812 = vrot.slane %v743, %v811
    %vm813 = vcmask 392512
    %v814 = vsel %vm813, %v812, %v807
    %v815 = vadd.s32 %v775, 4294967248
    %v816 = vlaneseq
    %v817 = vshrl.u32 %v816, 7
    %v818 = vsub.s32 %v815, %v817
    %v819 = vrot.slane %v746, %v818
    %vm820 = vcmask 458112
    %v821 = vsel %vm820, %v819, %v814
    %v822 = vadd.s32 %v775, 4294967240
    %v823 = vlaneseq
    %v824 = vshrl.u32 %v823, 7
    %v825 = vsub.s32 %v822, %v824
    %v826 = vrot.slane %v749, %v825
    %vm827 = vcmask 523712
    %v828 = vsel %vm827, %v826, %v821
    %v829 = vadd.s32 %v775, 4294967232
    %v830 = vlaneseq
    %v831 = vshrl.u32 %v830, 7
    %v832 = vsub.s32 %v829, %v831
    %v833 = vrot.slane %v752, %v832
    %vm834 = vcmask 589312
    %v835 = vsel %vm834, %v833, %v828
    %v836 = vadd.s32 %v775, 4294967224
    %v837 = vlaneseq
    %v838 = vshrl.u32 %v837, 7
    %v839 = vsub.s32 %v836, %v838
    %v840 = vrot.slane %v755, %v839
    %vm841 = vcmask 654912
    %v842 = vsel %vm841, %v840, %v835
    %v843 = vadd.s32 %v775, 4294967216
    %v844 = vlaneseq
    %v845 = vshrl.u32 %v844, 7
    %v846 = vsub.s32 %v843, %v845
    %v847 = vrot.slane %v758, %v846
    %vm848 = vcmask 720512
    %v849 = vsel %vm848, %v847, %v842
    %v850 = vadd.s32 %v775, 4294967208
    %v851 = vlaneseq
    %v852 = vshrl.u32 %v851, 7
    %v853 = vsub.s32 %v850, %v852
    %v854 = vrot.slane %v761, %v853
    %vm855 = vcmask 786112
    %v856 = vsel %vm855, %v854, %v849
    %v857 = vadd.s32 %v775, 4294967200
    %v858 = vlaneseq
    %v859 = vshrl.u32 %v858, 7
    %v860 = vsub.s32 %v857, %v859
    %v861 = vrot.slane %v764, %v860
    %vm862 = vcmask 851712
    %v863 = vsel %vm862, %v861, %v856
    %v864 = vadd.s32 %v775, 4294967192
    %v865 = vlaneseq
    %v866 = vshrl.u32 %v865, 7
    %v867 = vsub.s32 %v864, %v866
    %v868 = vrot.slane %v767, %v867
    %vm869 = vcmask 917312
    %v870 = vsel %vm869, %v868, %v863
    %v871 = vadd.s32 %v775, 4294967184
    %v872 = vlaneseq
    %v873 = vshrl.u32 %v872, 7
    %v874 = vsub.s32 %v871, %v873
    %v875 = vrot.slane %v770, %v874
    %vm876 = vcmask 982912
    %v877 = vsel %vm876, %v875, %v870
    %v878 = vadd.s32 %v775, 4294967176
    %v879 = vlaneseq
    %v880 = vshrl.u32 %v879, 7
    %v881 = vsub.s32 %v878, %v880
    %v882 = vrot.slane %v773, %v881
    %vm883 = vcmask 1048512
    %v884 = vsel %vm883, %v882, %v877
    %886 = vst [vmem:[#allocation3] sm:$0x1] %v884
    // Predicated region
    $region38: #{tpu_custom_call.1} parent=1 // pred_check
      _
    $region39: #{tpu_custom_call.1} parent=1 // pred_check_branch
      %888 = sbr.rel (0) target = $region41
    $region40: #{tpu_custom_call.1} parent=1 // pred_region
      %s890 = ssub.s32 16, 16
      %891 = vsyncadd [#allocation4], %s890
      %s893 = sshll.u32 [#allocation3], 4
      %s894 = int_to_ptr.vmem [resolvable:$true] %s893
      %896 = dma.vmem_to_hbm [thread:$0]  %s894, 16, %s9, [#allocation4]
    $region41: #{tpu_custom_call.1} parent=1 // pred_fallthru
      _
    // Predicated region
    $region42: #{tpu_custom_call.1} parent=1 // pred_check
      _
    $region43: #{tpu_custom_call.1} parent=1 // pred_check_branch
      %898 = sbr.rel (0) target = $region45
    $region44: #{tpu_custom_call.1} parent=1 // pred_region
      %899 = dma.done [#allocation4], 16
    $region45: #{tpu_custom_call.1} parent=1 // pred_fallthru
      _
    %900 = vsyncpa [#allocation4], 1

// kernel: tpu_custom_call.1
$region0: #{tpu_custom_call.1}
  #allocation0 [shape = 'u32[]', space=smem, size = 0x4, offset = 0x4, fixed_abs, tag = 'smem constant byte address 0x4 - core index']
  #allocation1 [shape = 'u32[144,128]{1,0:T(1,128)}', space=vmem, size = 0x12000, scoped, tag = 'internal scratch']
  #allocation2 [shape = 'f32[1,1]{1,0:T(1,128)S(1)}', space=vmem, size = 0x200, scoped, tag = 'scoped memory for tpu_custom_call.1']
  %s0 = inlined_call_operand.vmem [shape: bf16[128,12], index: 0, kind: input, shape index: {}]
  %s1 = inlined_call_operand.vmem [shape: bf16[128,4], index: 1, kind: input, shape index: {}]
  %s2 = inlined_call_operand.vmem [shape: bf16[12,32], index: 2, kind: input, shape index: {}]
  %s3 = inlined_call_operand.vmem [shape: bf16[4,32], index: 3, kind: input, shape index: {}]
  %s4 = inlined_call_operand.vmem [shape: f32[1,32], index: 4, kind: input, shape index: {}]
  %s5 = inlined_call_operand.vmem [shape: bf16[32,32], index: 5, kind: input, shape index: {}]
  %s6 = inlined_call_operand.vmem [shape: f32[1,32], index: 6, kind: input, shape index: {}]
  %s7 = inlined_call_operand.vmem [shape: f32[1,32], index: 7, kind: input, shape index: {}]
  %s8 = inlined_call_operand.<no memory space> [shape: f32[1,1], index: 8, kind: input, shape index: {}]
  %s9 = inlined_call_operand.vmem [shape: f32[128,1], index: 9, kind: output, shape index: {}]
  %s10 = sld [smem:[#allocation0]]
  $region46: #{tpu_custom_call.1} parent=0
    _
  %s12 = ssub.s32 1, %s10
  %s13 = scalar_select 0, %s12, %s10
  %v14 = vstv %s8
  %15 = vst [vmem:[#allocation2] sm:$0x1] %v14
  // Predicated region
  $region2: #{tpu_custom_call.1} parent=0 // pred_check
    _
  $region3: #{tpu_custom_call.1} parent=0 // pred_check_branch
    %17 = sbr.rel (0) target = $region5
  $region4: #{tpu_custom_call.1} parent=0 // pred_region
    _
  $region5: #{tpu_custom_call.1} parent=0 // pred_fallthru
    _
  // Predicated region
  $region6: #{tpu_custom_call.1} parent=0 // pred_check
    _
  $region7: #{tpu_custom_call.1} parent=0 // pred_check_branch
    %19 = sbr.rel (0) target = $region9
  $region8: #{tpu_custom_call.1} parent=0 // pred_region
    _
  $region9: #{tpu_custom_call.1} parent=0 // pred_fallthru
    _
  // Predicated region
  $region10: #{tpu_custom_call.1} parent=0 // pred_check
    _
  $region11: #{tpu_custom_call.1} parent=0 // pred_check_branch
    %21 = sbr.rel (0) target = $region13
  $region12: #{tpu_custom_call.1} parent=0 // pred_region
    _
  $region13: #{tpu_custom_call.1} parent=0 // pred_fallthru
    _
  // Predicated region
  $region14: #{tpu_custom_call.1} parent=0 // pred_check
    _
  $region15: #{tpu_custom_call.1} parent=0 // pred_check_branch
    %23 = sbr.rel (0) target = $region17
  $region16: #{tpu_custom_call.1} parent=0 // pred_region
    _
  $region17: #{tpu_custom_call.1} parent=0 // pred_fallthru
    _
  // Predicated region
  $region18: #{tpu_custom_call.1} parent=0 // pred_check
    _
  $region19: #{tpu_custom_call.1} parent=0 // pred_check_branch
    %25 = sbr.rel (0) target = $region21
  $region20: #{tpu_custom_call.1} parent=0 // pred_region
    _
  $region21: #{tpu_custom_call.1} parent=0 // pred_fallthru
    _
  // Predicated region
  $region22: #{tpu_custom_call.1} parent=0 // pred_check
    _
  $region23: #{tpu_custom_call.1} parent=0 // pred_check_branch
    %27 = sbr.rel (0) target = $region25
  $region24: #{tpu_custom_call.1} parent=0 // pred_region
    _
  $region25: #{tpu_custom_call.1} parent=0 // pred_fallthru
    _
  // Predicated region
  $region26: #{tpu_custom_call.1} parent=0 // pred_check
    _
  $region27: #{tpu_custom_call.1} parent=0 // pred_check_branch
    %29 = sbr.rel (0) target = $region29
  $region28: #{tpu_custom_call.1} parent=0 // pred_region
    _
  $region29: #{tpu_custom_call.1} parent=0 // pred_fallthru
    _
  // Predicated region
  $region30: #{tpu_custom_call.1} parent=0 // pred_check
    _
  $region31: #{tpu_custom_call.1} parent=0 // pred_check_branch
    %31 = sbr.rel (0) target = $region33
  $region32: #{tpu_custom_call.1} parent=0 // pred_region
    _
  $region33: #{tpu_custom_call.1} parent=0 // pred_fallthru
    _
  // Predicated region
  $region34: #{tpu_custom_call.1} parent=0 // pred_check
    _
  $region35: #{tpu_custom_call.1} parent=0 // pred_check_branch
    %33 = sbr.rel (0) target = $region37
  $region36: #{tpu_custom_call.1} parent=0 // pred_region
    _
  $region37: #{tpu_custom_call.1} parent=0 // pred_fallthru
    _
  %v35 = vld [vmem:[%s0] sm:$0xf]
  %v36 = vld [vmem:[%s0 + $0x4] sm:$0xf]
  %v37 = vld [vmem:[%s0 + $0x8] sm:$0xf]
  %v38 = vld [vmem:[%s0 + $0xc] sm:$0xf]
  %v39 = vld [vmem:[%s0 + $0x10] sm:$0xf]
  %v40 = vld [vmem:[%s0 + $0x14] sm:$0xf]
  %v41 = vld [vmem:[%s0 + $0x18] sm:$0xf]
  %v42 = vld [vmem:[%s0 + $0x1c] sm:$0xf]
  %v43 = vld [vmem:[%s0 + $0x20] sm:$0xf]
  %v44 = vld [vmem:[%s0 + $0x24] sm:$0xf]
  %v45 = vld [vmem:[%s0 + $0x28] sm:$0xf]
  %v46 = vld [vmem:[%s0 + $0x2c] sm:$0xf]
  %v47 = vld [vmem:[%s0 + $0x30] sm:$0xf]
  %v48 = vld [vmem:[%s0 + $0x34] sm:$0xf]
  %v49 = vld [vmem:[%s0 + $0x38] sm:$0xf]
  %v50 = vld [vmem:[%s0 + $0x3c] sm:$0xf]
  %v51 = vld [vmem:[%s2] sm:$0xf]
  %v52 = vld [vmem:[%s2 + $0x4] sm:$0x3]
  %v53 = vld [vmem:[%s1] sm:$0xf]
  %v54 = vld [vmem:[%s1 + $0x4] sm:$0xf]
  %v55 = vld [vmem:[%s1 + $0x8] sm:$0xf]
  %v56 = vld [vmem:[%s1 + $0xc] sm:$0xf]
  %v57 = vld [vmem:[%s1 + $0x10] sm:$0xf]
  %v58 = vld [vmem:[%s1 + $0x14] sm:$0xf]
  %v59 = vld [vmem:[%s1 + $0x18] sm:$0xf]
  %v60 = vld [vmem:[%s1 + $0x1c] sm:$0xf]
  %v61 = vld [vmem:[%s1 + $0x20] sm:$0xf]
  %v62 = vld [vmem:[%s1 + $0x24] sm:$0xf]
  %v63 = vld [vmem:[%s1 + $0x28] sm:$0xf]
  %v64 = vld [vmem:[%s1 + $0x2c] sm:$0xf]
  %v65 = vld [vmem:[%s1 + $0x30] sm:$0xf]
  %v66 = vld [vmem:[%s1 + $0x34] sm:$0xf]
  %v67 = vld [vmem:[%s1 + $0x38] sm:$0xf]
  %v68 = vld [vmem:[%s1 + $0x3c] sm:$0xf]
  %v69 = vld [vmem:[%s3] sm:$0x3]
  %v86 = vunpack.c.l.b16 %v53
  %v87 = vunpack.c.l.b16 %v54
  %v88 = vunpack.c.l.b16 %v55
  %v89 = vunpack.c.l.b16 %v56
  %v90 = vunpack.c.l.b16 %v57
  %v91 = vunpack.c.l.b16 %v58
  %v92 = vunpack.c.l.b16 %v59
  %v93 = vunpack.c.l.b16 %v60
  %v94 = vunpack.c.l.b16 %v61
  %v95 = vunpack.c.l.b16 %v62
  %v96 = vunpack.c.l.b16 %v63
  %v97 = vunpack.c.l.b16 %v64
  %v98 = vunpack.c.l.b16 %v65
  %v99 = vunpack.c.l.b16 %v66
  %v100 = vunpack.c.l.b16 %v67
  %v101 = vunpack.c.l.b16 %v68
  %v102 = vpack.c.b16 %v87, %v86
  %v103 = vpack.c.b16 %v89, %v88
  %v104 = vpack.c.b16 %v91, %v90
  %v105 = vpack.c.b16 %v93, %v92
  %v106 = vpack.c.b16 %v95, %v94
  %v107 = vpack.c.b16 %v97, %v96
  %v108 = vpack.c.b16 %v99, %v98
  %v109 = vpack.c.b16 %v101, %v100
  %vm110 = vcmask 31744
  %v112 = vsel %vm110, %v102, 0
  %v115 = vsel %vm110, %v103, 0
  %v118 = vsel %vm110, %v104, 0
  %v121 = vsel %vm110, %v105, 0
  %v124 = vsel %vm110, %v106, 0
  %v127 = vsel %vm110, %v107, 0
  %v130 = vsel %vm110, %v108, 0
  %v133 = vsel %vm110, %v109, 0
  %vm135 = vcmask 1041408
  %v137 = vsel %vm135, %v69, 0
  %139 = vmatprep.subr.bf16.mxu0 0
  %140 = vmatpush1.bf16.msra.mxu0 0
  %141 = vmatprep.subr.bf16.mxu0 0
  %142 = vmatpush1.bf16.msra.mxu0 0
  %143 = vmatprep.subr.bf16.mxu0 0
  %144 = vmatpush1.bf16.msra.mxu0 0
  %145 = vmatprep.subr.bf16.mxu0 0
  %146 = vmatpush1.bf16.msra.mxu0 0
  %147 = vmatprep.subr.bf16.mxu0 0
  %148 = vmatpush1.bf16.msra.mxu0 0
  %149 = vmatprep.subr.bf16.mxu0 0
  %150 = vmatpush1.bf16.msra.mxu0 0
  %151 = vmatprep.subr.bf16.mxu0 0
  %152 = vmatpush1.bf16.msra.mxu0 0
  %153 = vmatprep.subr.bf16.mxu0 0
  %154 = vmatpush1.bf16.msra.mxu0 %v137
  %155 = vmatprep.subr.bf16.mxu0 0
  %156 = vmatpush2.bf16.msra.mxu0 0
  %157 = vmatprep.subr.bf16.mxu0 0
  %158 = vmatpush2.bf16.msra.mxu0 0
  %159 = vmatprep.subr.bf16.mxu0 0
  %160 = vmatpush2.bf16.msra.mxu0 0
  %161 = vmatprep.subr.bf16.mxu0 0
  %162 = vmatpush2.bf16.msra.mxu0 0
  %163 = vmatprep.subr.bf16.mxu0 0
  %164 = vmatpush2.bf16.msra.mxu0 0
  %165 = vmatprep.subr.bf16.mxu0 0
  %166 = vmatpush2.bf16.msra.mxu0 0
  %167 = vmatprep.subr.bf16.mxu0 0
  %168 = vmatpush2.bf16.msra.mxu0 0
  %169 = vmatprep.subr.bf16.mxu0 0
  %170 = vmatpush2.bf16.msra.mxu0 0
  %171 = vmatprep.mubr.bf16.mxu0 0
  %172 = vmatmul.mubr.bf16.gmra.mxu0 %v112
  %v173 = vpop.f32.mrf.mxu0
  %v174 = vadd.f32 0.0, %v173
  %v175 = vpop.f32.mrf.mxu0
  %v176 = vpop.f32.mrf.mxu0
  %v177 = vadd.f32 0.0, %v176
  %v178 = vpop.f32.mrf.mxu0
  %179 = vmatprep.mubr.bf16.mxu0 0
  %180 = vmatmul.mubr.bf16.gmra.mxu0 %v115
  %v181 = vpop.f32.mrf.mxu0
  %v182 = vadd.f32 0.0, %v181
  %v183 = vpop.f32.mrf.mxu0
  %v184 = vpop.f32.mrf.mxu0
  %v185 = vadd.f32 0.0, %v184
  %v186 = vpop.f32.mrf.mxu0
  %187 = vmatprep.mubr.bf16.mxu0 0
  %188 = vmatmul.mubr.bf16.gmra.mxu0 %v118
  %v189 = vpop.f32.mrf.mxu0
  %v190 = vadd.f32 0.0, %v189
  %v191 = vpop.f32.mrf.mxu0
  %v192 = vpop.f32.mrf.mxu0
  %v193 = vadd.f32 0.0, %v192
  %v194 = vpop.f32.mrf.mxu0
  %195 = vmatprep.mubr.bf16.mxu0 0
  %196 = vmatmul.mubr.bf16.gmra.mxu0 %v121
  %v197 = vpop.f32.mrf.mxu0
  %v198 = vadd.f32 0.0, %v197
  %v199 = vpop.f32.mrf.mxu0
  %v200 = vpop.f32.mrf.mxu0
  %v201 = vadd.f32 0.0, %v200
  %v202 = vpop.f32.mrf.mxu0
  %203 = vmatprep.mubr.bf16.mxu0 0
  %204 = vmatmul.mubr.bf16.gmra.mxu0 %v124
  %v205 = vpop.f32.mrf.mxu0
  %v206 = vadd.f32 0.0, %v205
  %v207 = vpop.f32.mrf.mxu0
  %v208 = vpop.f32.mrf.mxu0
  %v209 = vadd.f32 0.0, %v208
  %v210 = vpop.f32.mrf.mxu0
  %211 = vmatprep.mubr.bf16.mxu0 0
  %212 = vmatmul.mubr.bf16.gmra.mxu0 %v127
  %v213 = vpop.f32.mrf.mxu0
  %v214 = vadd.f32 0.0, %v213
  %v215 = vpop.f32.mrf.mxu0
  %v216 = vpop.f32.mrf.mxu0
  %v217 = vadd.f32 0.0, %v216
  %v218 = vpop.f32.mrf.mxu0
  %219 = vmatprep.mubr.bf16.mxu0 0
  %220 = vmatmul.mubr.bf16.gmra.mxu0 %v130
  %v221 = vpop.f32.mrf.mxu0
  %v222 = vadd.f32 0.0, %v221
  %v223 = vpop.f32.mrf.mxu0
  %v224 = vpop.f32.mrf.mxu0
  %v225 = vadd.f32 0.0, %v224
  %v226 = vpop.f32.mrf.mxu0
  %227 = vmatprep.mubr.bf16.mxu0 0
  %228 = vmatmul.mubr.bf16.gmra.mxu0 %v133
  %v229 = vpop.f32.mrf.mxu0
  %v230 = vadd.f32 0.0, %v229
  %v231 = vpop.f32.mrf.mxu0
  %v232 = vpop.f32.mrf.mxu0
  %v233 = vadd.f32 0.0, %v232
  %v234 = vpop.f32.mrf.mxu0
  %235 = vdwg.mxu0
  %v252 = vunpack.c.l.b16 %v35
  %v253 = vunpack.c.l.b16 %v36
  %v254 = vunpack.c.l.b16 %v37
  %v255 = vunpack.c.l.b16 %v38
  %v256 = vunpack.c.l.b16 %v39
  %v257 = vunpack.c.l.b16 %v40
  %v258 = vunpack.c.l.b16 %v41
  %v259 = vunpack.c.l.b16 %v42
  %v260 = vunpack.c.l.b16 %v43
  %v261 = vunpack.c.l.b16 %v44
  %v262 = vunpack.c.l.b16 %v45
  %v263 = vunpack.c.l.b16 %v46
  %v264 = vunpack.c.l.b16 %v47
  %v265 = vunpack.c.l.b16 %v48
  %v266 = vunpack.c.l.b16 %v49
  %v267 = vunpack.c.l.b16 %v50
  %v268 = vpack.c.b16 %v253, %v252
  %v269 = vpack.c.b16 %v255, %v254
  %v270 = vpack.c.b16 %v257, %v256
  %v271 = vpack.c.b16 %v259, %v258
  %v272 = vpack.c.b16 %v261, %v260
  %v273 = vpack.c.b16 %v263, %v262
  %v274 = vpack.c.b16 %v265, %v264
  %v275 = vpack.c.b16 %v267, %v266
  %v278 = vunpack.c.l.b16 %v51
  %v279 = vunpack.c.l.b16 %v52
  %v280 = vpack.c.b16 %v279, %v278
  %vm281 = vcmask 97280
  %v283 = vsel %vm281, %v268, 0
  %v286 = vsel %vm281, %v269, 0
  %v289 = vsel %vm281, %v270, 0
  %v292 = vsel %vm281, %v271, 0
  %v295 = vsel %vm281, %v272, 0
  %v298 = vsel %vm281, %v273, 0
  %v301 = vsel %vm281, %v274, 0
  %v304 = vsel %vm281, %v275, 0
  %vm306 = vcmask 1045504
  %v308 = vsel %vm306, %v280, 0
  %310 = vmatprep.subr.bf16.mxu0 0
  %311 = vmatpush1.bf16.msra.mxu0 0
  %312 = vmatprep.subr.bf16.mxu0 0
  %313 = vmatpush1.bf16.msra.mxu0 0
  %314 = vmatprep.subr.bf16.mxu0 0
  %315 = vmatpush1.bf16.msra.mxu0 0
  %316 = vmatprep.subr.bf16.mxu0 0
  %317 = vmatpush1.bf16.msra.mxu0 0
  %318 = vmatprep.subr.bf16.mxu0 0
  %319 = vmatpush1.bf16.msra.mxu0 0
  %320 = vmatprep.subr.bf16.mxu0 0
  %321 = vmatpush1.bf16.msra.mxu0 0
  %322 = vmatprep.subr.bf16.mxu0 0
  %323 = vmatpush1.bf16.msra.mxu0 0
  %324 = vmatprep.subr.bf16.mxu0 0
  %325 = vmatpush1.bf16.msra.mxu0 %v308
  %326 = vmatprep.subr.bf16.mxu0 0
  %327 = vmatpush2.bf16.msra.mxu0 0
  %328 = vmatprep.subr.bf16.mxu0 0
  %329 = vmatpush2.bf16.msra.mxu0 0
  %330 = vmatprep.subr.bf16.mxu0 0
  %331 = vmatpush2.bf16.msra.mxu0 0
  %332 = vmatprep.subr.bf16.mxu0 0
  %333 = vmatpush2.bf16.msra.mxu0 0
  %334 = vmatprep.subr.bf16.mxu0 0
  %335 = vmatpush2.bf16.msra.mxu0 0
  %336 = vmatprep.subr.bf16.mxu0 0
  %337 = vmatpush2.bf16.msra.mxu0 0
  %338 = vmatprep.subr.bf16.mxu0 0
  %339 = vmatpush2.bf16.msra.mxu0 0
  %340 = vmatprep.subr.bf16.mxu0 0
  %341 = vmatpush2.bf16.msra.mxu0 0
  %342 = vmatprep.mubr.bf16.mxu0 0
  %343 = vmatmul.mubr.bf16.gmra.mxu0 %v283
  %v344 = vpop.f32.mrf.mxu0
  %v345 = vadd.f32 %v174, %v344
  %v346 = vpop.f32.mrf.mxu0
  %v347 = vpop.f32.mrf.mxu0
  %v348 = vadd.f32 %v177, %v347
  %v349 = vpop.f32.mrf.mxu0
  %350 = vmatprep.mubr.bf16.mxu0 0
  %351 = vmatmul.mubr.bf16.gmra.mxu0 %v286
  %v352 = vpop.f32.mrf.mxu0
  %v353 = vadd.f32 %v182, %v352
  %v354 = vpop.f32.mrf.mxu0
  %v355 = vpop.f32.mrf.mxu0
  %v356 = vadd.f32 %v185, %v355
  %v357 = vpop.f32.mrf.mxu0
  %358 = vmatprep.mubr.bf16.mxu0 0
  %359 = vmatmul.mubr.bf16.gmra.mxu0 %v289
  %v360 = vpop.f32.mrf.mxu0
  %v361 = vadd.f32 %v190, %v360
  %v362 = vpop.f32.mrf.mxu0
  %v363 = vpop.f32.mrf.mxu0
  %v364 = vadd.f32 %v193, %v363
  %v365 = vpop.f32.mrf.mxu0
  %366 = vmatprep.mubr.bf16.mxu0 0
  %367 = vmatmul.mubr.bf16.gmra.mxu0 %v292
  %v368 = vpop.f32.mrf.mxu0
  %v369 = vadd.f32 %v198, %v368
  %v370 = vpop.f32.mrf.mxu0
  %v371 = vpop.f32.mrf.mxu0
  %v372 = vadd.f32 %v201, %v371
  %v373 = vpop.f32.mrf.mxu0
  %374 = vmatprep.mubr.bf16.mxu0 0
  %375 = vmatmul.mubr.bf16.gmra.mxu0 %v295
  %v376 = vpop.f32.mrf.mxu0
  %v377 = vadd.f32 %v206, %v376
  %v378 = vpop.f32.mrf.mxu0
  %v379 = vpop.f32.mrf.mxu0
  %v380 = vadd.f32 %v209, %v379
  %v381 = vpop.f32.mrf.mxu0
  %382 = vmatprep.mubr.bf16.mxu0 0
  %383 = vmatmul.mubr.bf16.gmra.mxu0 %v298
  %v384 = vpop.f32.mrf.mxu0
  %v385 = vadd.f32 %v214, %v384
  %v386 = vpop.f32.mrf.mxu0
  %v387 = vpop.f32.mrf.mxu0
  %v388 = vadd.f32 %v217, %v387
  %v389 = vpop.f32.mrf.mxu0
  %390 = vmatprep.mubr.bf16.mxu0 0
  %391 = vmatmul.mubr.bf16.gmra.mxu0 %v301
  %v392 = vpop.f32.mrf.mxu0
  %v393 = vadd.f32 %v222, %v392
  %v394 = vpop.f32.mrf.mxu0
  %v395 = vpop.f32.mrf.mxu0
  %v396 = vadd.f32 %v225, %v395
  %v397 = vpop.f32.mrf.mxu0
  %398 = vmatprep.mubr.bf16.mxu0 0
  %399 = vmatmul.mubr.bf16.gmra.mxu0 %v304
  %v400 = vpop.f32.mrf.mxu0
  %v401 = vadd.f32 %v230, %v400
  %v402 = vpop.f32.mrf.mxu0
  %v403 = vpop.f32.mrf.mxu0
  %v404 = vadd.f32 %v233, %v403
  %v405 = vpop.f32.mrf.mxu0
  %406 = vdwg.mxu0
  %v407 = vld [vmem:[%s4] sm:$0x1]
  %v409 = vlaneseq
  %v410 = vshrl.u32 %v409, 7
  %v411 = vsub.s32 0, %v410
  %v412 = vrot.slane %v407, %v411
  %v414 = vadd.f32 %v345, %v412
  %v415 = vadd.f32 %v348, %v412
  %v416 = vadd.f32 %v353, %v412
  %v417 = vadd.f32 %v356, %v412
  %v418 = vadd.f32 %v361, %v412
  %v419 = vadd.f32 %v364, %v412
  %v420 = vadd.f32 %v369, %v412
  %v421 = vadd.f32 %v372, %v412
  %v422 = vadd.f32 %v377, %v412
  %v423 = vadd.f32 %v380, %v412
  %v424 = vadd.f32 %v385, %v412
  %v425 = vadd.f32 %v388, %v412
  %v426 = vadd.f32 %v393, %v412
  %v427 = vadd.f32 %v396, %v412
  %v428 = vadd.f32 %v401, %v412
  %v429 = vadd.f32 %v404, %v412
  %v430 = vmax.f32 %v414, 0.0
  %v431 = vmax.f32 %v415, 0.0
  %v432 = vmax.f32 %v416, 0.0
  %v433 = vmax.f32 %v417, 0.0
  %v434 = vmax.f32 %v418, 0.0
  %v435 = vmax.f32 %v419, 0.0
  %v436 = vmax.f32 %v420, 0.0
  %v437 = vmax.f32 %v421, 0.0
  %v438 = vmax.f32 %v422, 0.0
  %v439 = vmax.f32 %v423, 0.0
  %v440 = vmax.f32 %v424, 0.0
  %v441 = vmax.f32 %v425, 0.0
  %v442 = vmax.f32 %v426, 0.0
  %v443 = vmax.f32 %v427, 0.0
  %v444 = vmax.f32 %v428, 0.0
  %v445 = vmax.f32 %v429, 0.0
  %v446 = vpack.c.bf16 %v431, %v430
  %v447 = vpack.c.bf16 %v433, %v432
  %v448 = vpack.c.bf16 %v435, %v434
  %v449 = vpack.c.bf16 %v437, %v436
  %v450 = vpack.c.bf16 %v439, %v438
  %v451 = vpack.c.bf16 %v441, %v440
  %v452 = vpack.c.bf16 %v443, %v442
  %v453 = vpack.c.bf16 %v445, %v444
  %v454 = vld [vmem:[%s5] sm:$0xf]
  %v455 = vld [vmem:[%s5 + $0x4] sm:$0xf]
  %v456 = vld [vmem:[%s5 + $0x8] sm:$0xf]
  %v457 = vld [vmem:[%s5 + $0xc] sm:$0xf]
  %v458 = vld [vmem:[%s6] sm:$0x1]
  %v460 = vlaneseq
  %v461 = vshrl.u32 %v460, 7
  %v462 = vsub.s32 0, %v461
  %v463 = vrot.slane %v458, %v462
  %v469 = vunpack.c.l.b16 %v454
  %v470 = vunpack.c.l.b16 %v455
  %v471 = vunpack.c.l.b16 %v456
  %v472 = vunpack.c.l.b16 %v457
  %v473 = vpack.c.b16 %v470, %v469
  %v474 = vpack.c.b16 %v472, %v471
  %vm477 = vcmask 261120
  %v479 = vsel %vm477, %v446, 0
  %v482 = vsel %vm477, %v447, 0
  %v485 = vsel %vm477, %v448, 0
  %v488 = vsel %vm477, %v449, 0
  %v491 = vsel %vm477, %v450, 0
  %v494 = vsel %vm477, %v451, 0
  %v497 = vsel %vm477, %v452, 0
  %v500 = vsel %vm477, %v453, 0
  %502 = vmatprep.subr.bf16.mxu0 0
  %503 = vmatpush1.bf16.msra.mxu0 0
  %504 = vmatprep.subr.bf16.mxu0 0
  %505 = vmatpush1.bf16.msra.mxu0 0
  %506 = vmatprep.subr.bf16.mxu0 0
  %507 = vmatpush1.bf16.msra.mxu0 0
  %508 = vmatprep.subr.bf16.mxu0 0
  %509 = vmatpush1.bf16.msra.mxu0 0
  %510 = vmatprep.subr.bf16.mxu0 0
  %511 = vmatpush1.bf16.msra.mxu0 0
  %512 = vmatprep.subr.bf16.mxu0 0
  %513 = vmatpush1.bf16.msra.mxu0 0
  %514 = vmatprep.subr.bf16.mxu0 0
  %515 = vmatpush1.bf16.msra.mxu0 %v474
  %516 = vmatprep.subr.bf16.mxu0 0
  %517 = vmatpush1.bf16.msra.mxu0 %v473
  %518 = vmatprep.subr.bf16.mxu0 0
  %519 = vmatpush2.bf16.msra.mxu0 0
  %520 = vmatprep.subr.bf16.mxu0 0
  %521 = vmatpush2.bf16.msra.mxu0 0
  %522 = vmatprep.subr.bf16.mxu0 0
  %523 = vmatpush2.bf16.msra.mxu0 0
  %524 = vmatprep.subr.bf16.mxu0 0
  %525 = vmatpush2.bf16.msra.mxu0 0
  %526 = vmatprep.subr.bf16.mxu0 0
  %527 = vmatpush2.bf16.msra.mxu0 0
  %528 = vmatprep.subr.bf16.mxu0 0
  %529 = vmatpush2.bf16.msra.mxu0 0
  %530 = vmatprep.subr.bf16.mxu0 0
  %531 = vmatpush2.bf16.msra.mxu0 0
  %532 = vmatprep.subr.bf16.mxu0 0
  %533 = vmatpush2.bf16.msra.mxu0 0
  %534 = vmatprep.mubr.bf16.mxu0 0
  %535 = vmatmul.mubr.bf16.gmra.mxu0 %v479
  %v536 = vpop.f32.mrf.mxu0
  %v537 = vadd.f32 %v463, %v536
  %v538 = vpop.f32.mrf.mxu0
  %v539 = vpop.f32.mrf.mxu0
  %v540 = vadd.f32 %v463, %v539
  %v541 = vpop.f32.mrf.mxu0
  %542 = vmatprep.mubr.bf16.mxu0 0
  %543 = vmatmul.mubr.bf16.gmra.mxu0 %v482
  %v544 = vpop.f32.mrf.mxu0
  %v545 = vadd.f32 %v463, %v544
  %v546 = vpop.f32.mrf.mxu0
  %v547 = vpop.f32.mrf.mxu0
  %v548 = vadd.f32 %v463, %v547
  %v549 = vpop.f32.mrf.mxu0
  %550 = vmatprep.mubr.bf16.mxu0 0
  %551 = vmatmul.mubr.bf16.gmra.mxu0 %v485
  %v552 = vpop.f32.mrf.mxu0
  %v553 = vadd.f32 %v463, %v552
  %v554 = vpop.f32.mrf.mxu0
  %v555 = vpop.f32.mrf.mxu0
  %v556 = vadd.f32 %v463, %v555
  %v557 = vpop.f32.mrf.mxu0
  %558 = vmatprep.mubr.bf16.mxu0 0
  %559 = vmatmul.mubr.bf16.gmra.mxu0 %v488
  %v560 = vpop.f32.mrf.mxu0
  %v561 = vadd.f32 %v463, %v560
  %v562 = vpop.f32.mrf.mxu0
  %v563 = vpop.f32.mrf.mxu0
  %v564 = vadd.f32 %v463, %v563
  %v565 = vpop.f32.mrf.mxu0
  %566 = vmatprep.mubr.bf16.mxu0 0
  %567 = vmatmul.mubr.bf16.gmra.mxu0 %v491
  %v568 = vpop.f32.mrf.mxu0
  %v569 = vadd.f32 %v463, %v568
  %v570 = vpop.f32.mrf.mxu0
  %v571 = vpop.f32.mrf.mxu0
  %v572 = vadd.f32 %v463, %v571
  %v573 = vpop.f32.mrf.mxu0
  %574 = vmatprep.mubr.bf16.mxu0 0
  %575 = vmatmul.mubr.bf16.gmra.mxu0 %v494
  %v576 = vpop.f32.mrf.mxu0
  %v577 = vadd.f32 %v463, %v576
  %v578 = vpop.f32.mrf.mxu0
  %v579 = vpop.f32.mrf.mxu0
  %v580 = vadd.f32 %v463, %v579
  %v581 = vpop.f32.mrf.mxu0
  %582 = vmatprep.mubr.bf16.mxu0 0
  %583 = vmatmul.mubr.bf16.gmra.mxu0 %v497
  %v584 = vpop.f32.mrf.mxu0
  %v585 = vadd.f32 %v463, %v584
  %v586 = vpop.f32.mrf.mxu0
  %v587 = vpop.f32.mrf.mxu0
  %v588 = vadd.f32 %v463, %v587
  %v589 = vpop.f32.mrf.mxu0
  %590 = vmatprep.mubr.bf16.mxu0 0
  %591 = vmatmul.mubr.bf16.gmra.mxu0 %v500
  %v592 = vpop.f32.mrf.mxu0
  %v593 = vadd.f32 %v463, %v592
  %v594 = vpop.f32.mrf.mxu0
  %v595 = vpop.f32.mrf.mxu0
  %v596 = vadd.f32 %v463, %v595
  %v597 = vpop.f32.mrf.mxu0
  %598 = vdwg.mxu0
  %v599 = vmax.f32 %v537, 0.0
  %v600 = vmax.f32 %v540, 0.0
  %v601 = vmax.f32 %v545, 0.0
  %v602 = vmax.f32 %v548, 0.0
  %v603 = vmax.f32 %v553, 0.0
  %v604 = vmax.f32 %v556, 0.0
  %v605 = vmax.f32 %v561, 0.0
  %v606 = vmax.f32 %v564, 0.0
  %v607 = vmax.f32 %v569, 0.0
  %v608 = vmax.f32 %v572, 0.0
  %v609 = vmax.f32 %v577, 0.0
  %v610 = vmax.f32 %v580, 0.0
  %v611 = vmax.f32 %v585, 0.0
  %v612 = vmax.f32 %v588, 0.0
  %v613 = vmax.f32 %v593, 0.0
  %v614 = vmax.f32 %v596, 0.0
  %v615 = vld [vmem:[%s7] sm:$0x1]
  %v617 = vlaneseq
  %v618 = vshrl.u32 %v617, 7
  %v619 = vsub.s32 0, %v618
  %v620 = vrot.slane %v615, %v619
  %v622 = vmul.f32 %v599, %v620
  %v623 = vmul.f32 %v600, %v620
  %v624 = vmul.f32 %v601, %v620
  %v625 = vmul.f32 %v602, %v620
  %v626 = vmul.f32 %v603, %v620
  %v627 = vmul.f32 %v604, %v620
  %v628 = vmul.f32 %v605, %v620
  %v629 = vmul.f32 %v606, %v620
  %v630 = vmul.f32 %v607, %v620
  %v631 = vmul.f32 %v608, %v620
  %v632 = vmul.f32 %v609, %v620
  %v633 = vmul.f32 %v610, %v620
  %v634 = vmul.f32 %v611, %v620
  %v635 = vmul.f32 %v612, %v620
  %v636 = vmul.f32 %v613, %v620
  %v637 = vmul.f32 %v614, %v620
  %v638 = vsel %vm477, %v622, 0.0
  %639 = vadd.xlane.f32.xlu0 %v638
  %v640 = vpop.xlane.xlu0 %639
  %v641 = vsel %vm477, %v623, 0.0
  %642 = vadd.xlane.f32.xlu0 %v641
  %v643 = vpop.xlane.xlu0 %642
  %v644 = vsel %vm477, %v624, 0.0
  %645 = vadd.xlane.f32.xlu0 %v644
  %v646 = vpop.xlane.xlu0 %645
  %v647 = vsel %vm477, %v625, 0.0
  %648 = vadd.xlane.f32.xlu0 %v647
  %v649 = vpop.xlane.xlu0 %648
  %v650 = vsel %vm477, %v626, 0.0
  %651 = vadd.xlane.f32.xlu0 %v650
  %v652 = vpop.xlane.xlu0 %651
  %v653 = vsel %vm477, %v627, 0.0
  %654 = vadd.xlane.f32.xlu0 %v653
  %v655 = vpop.xlane.xlu0 %654
  %v656 = vsel %vm477, %v628, 0.0
  %657 = vadd.xlane.f32.xlu0 %v656
  %v658 = vpop.xlane.xlu0 %657
  %v659 = vsel %vm477, %v629, 0.0
  %660 = vadd.xlane.f32.xlu0 %v659
  %v661 = vpop.xlane.xlu0 %660
  %v662 = vsel %vm477, %v630, 0.0
  %663 = vadd.xlane.f32.xlu0 %v662
  %v664 = vpop.xlane.xlu0 %663
  %v665 = vsel %vm477, %v631, 0.0
  %666 = vadd.xlane.f32.xlu0 %v665
  %v667 = vpop.xlane.xlu0 %666
  %v668 = vsel %vm477, %v632, 0.0
  %669 = vadd.xlane.f32.xlu0 %v668
  %v670 = vpop.xlane.xlu0 %669
  %v671 = vsel %vm477, %v633, 0.0
  %672 = vadd.xlane.f32.xlu0 %v671
  %v673 = vpop.xlane.xlu0 %672
  %v674 = vsel %vm477, %v634, 0.0
  %675 = vadd.xlane.f32.xlu0 %v674
  %v676 = vpop.xlane.xlu0 %675
  %v677 = vsel %vm477, %v635, 0.0
  %678 = vadd.xlane.f32.xlu0 %v677
  %v679 = vpop.xlane.xlu0 %678
  %v680 = vsel %vm477, %v636, 0.0
  %681 = vadd.xlane.f32.xlu0 %v680
  %v682 = vpop.xlane.xlu0 %681
  %v683 = vsel %vm477, %v637, 0.0
  %684 = vadd.xlane.f32.xlu0 %v683
  %v685 = vpop.xlane.xlu0 %684
  %v686 = vld [vmem:[#allocation2] sm:$0x1]
  %v688 = vlaneseq
  %v689 = vshrl.u32 %v688, 7
  %v690 = vsub.s32 0, %v689
  %v691 = vrot.slane %v686, %v690
  %v693 = vadd.f32 %v640, %v691
  %v694 = vadd.f32 %v643, %v691
  %v695 = vadd.f32 %v646, %v691
  %v696 = vadd.f32 %v649, %v691
  %v697 = vadd.f32 %v652, %v691
  %v698 = vadd.f32 %v655, %v691
  %v699 = vadd.f32 %v658, %v691
  %v700 = vadd.f32 %v661, %v691
  %v701 = vadd.f32 %v664, %v691
  %v702 = vadd.f32 %v667, %v691
  %v703 = vadd.f32 %v670, %v691
  %v704 = vadd.f32 %v673, %v691
  %v705 = vadd.f32 %v676, %v691
  %v706 = vadd.f32 %v679, %v691
  %v707 = vadd.f32 %v682, %v691
  %v708 = vadd.f32 %v685, %v691
  %vm709 = vcmask 7168
  %710 = vst.msk [vmem:[%s9] sm:$0xff] %vm709, %v693
  %711 = vst.msk [vmem:[%s9 + $0x8] sm:$0xff] %vm709, %v694
  %712 = vst.msk [vmem:[%s9 + $0x10] sm:$0xff] %vm709, %v695
  %713 = vst.msk [vmem:[%s9 + $0x18] sm:$0xff] %vm709, %v696
  %714 = vst.msk [vmem:[%s9 + $0x20] sm:$0xff] %vm709, %v697
  %715 = vst.msk [vmem:[%s9 + $0x28] sm:$0xff] %vm709, %v698
  %716 = vst.msk [vmem:[%s9 + $0x30] sm:$0xff] %vm709, %v699
  %717 = vst.msk [vmem:[%s9 + $0x38] sm:$0xff] %vm709, %v700
  %718 = vst.msk [vmem:[%s9 + $0x40] sm:$0xff] %vm709, %v701
  %719 = vst.msk [vmem:[%s9 + $0x48] sm:$0xff] %vm709, %v702
  %720 = vst.msk [vmem:[%s9 + $0x50] sm:$0xff] %vm709, %v703
  %721 = vst.msk [vmem:[%s9 + $0x58] sm:$0xff] %vm709, %v704
  %722 = vst.msk [vmem:[%s9 + $0x60] sm:$0xff] %vm709, %v705
  %723 = vst.msk [vmem:[%s9 + $0x68] sm:$0xff] %vm709, %v706
  %724 = vst.msk [vmem:[%s9 + $0x70] sm:$0xff] %vm709, %v707
  %725 = vst.msk [vmem:[%s9 + $0x78] sm:$0xff] %vm709, %v708
  // Predicated region
  $region38: #{tpu_custom_call.1} parent=0 // pred_check
    _
  $region39: #{tpu_custom_call.1} parent=0 // pred_check_branch
    %727 = sbr.rel (0) target = $region41
  $region40: #{tpu_custom_call.1} parent=0 // pred_region
    _
  $region41: #{tpu_custom_call.1} parent=0 // pred_fallthru
    _
  // Predicated region
  $region42: #{tpu_custom_call.1} parent=0 // pred_check
    _
  $region43: #{tpu_custom_call.1} parent=0 // pred_check_branch
    %729 = sbr.rel (0) target = $region45
  $region44: #{tpu_custom_call.1} parent=0 // pred_region
    _
  $region45: #{tpu_custom_call.1} parent=0 // pred_fallthru
    _

</llo_original>
